<compile_context>
chip_gen: v6e
topology: v6e:2x2x1
jax: 0.10.0
libtpu: 0.0.40
codegen_flags: <defaults>
</compile_context>

<pallas_src>
import jax
import jax.numpy as jnp
from jax.experimental import pallas as pl
from jax.experimental.pallas import tpu as pltpu

INPUT_SIZE = 28 * 28   # 784
H1, H2, H3 = 512, 256, 128
OUTPUT_SIZE = 10
OUT_PAD = 128          # lane-dense output width (>= OUTPUT_SIZE, multiple of 128)


def _mlp_kernel(x_ref,
                w1_ref, b1_ref,
                w2_ref, b2_ref,
                w3_ref, b3_ref,
                w4_ref, b4_ref,
                o_ref):
    # x tile: (TB, 784) f32 -> cast to bf16 in-kernel (VPU, hidden under the MXU).
    x = x_ref[...].astype(jnp.bfloat16)

    h = jnp.dot(x, w1_ref[...], preferred_element_type=jnp.float32) + b1_ref[...]
    h = jnp.maximum(h, 0.0).astype(jnp.bfloat16)              # ReLU, bf16 for next MXU dot

    h = jnp.dot(h, w2_ref[...], preferred_element_type=jnp.float32) + b2_ref[...]
    h = jnp.maximum(h, 0.0).astype(jnp.bfloat16)              # ReLU

    h = jnp.dot(h, w3_ref[...], preferred_element_type=jnp.float32) + b3_ref[...]
    h = jnp.maximum(h, 0.0).astype(jnp.bfloat16)              # ReLU

    # Final layer is padded to 128 output lanes -> full-width (unmasked) store.
    logits = jnp.dot(h, w4_ref[...], preferred_element_type=jnp.float32) + b4_ref[...]
    o_ref[...] = jax.nn.sigmoid(logits)                       # extra lanes are free EUP filler


def _choose_tile(B, tb):
    """Pick (TB, B_pad).

    Preferences: no jnp.pad copy of x, TB a multiple of 16 (sublane packing),
    >=2 grid steps when B is large enough (v7x megacore), and TB as large as
    possible (up to tb) to amortize per-grid-step overhead.
    """
    if B <= tb:
        # Split into 2 tiles (for the 2 TensorCores on v7x) when cheaply possible.
        if B >= 512 and B % 2 == 0 and (B // 2) % 16 == 0:
            return B // 2, B
        # Single tile covering the whole batch (block == full dim, no pad).
        return B, B
    # Large batch: largest tile <= tb that divides B exactly (no pad copy).
    for cand in range(tb, 15, -1):
        if cand % 16 == 0 and B % cand == 0:
            return cand, B
    # Fallback: pad B up to a multiple of tb.
    return tb, pl.cdiv(B, tb) * tb


def net_forward(x, params, *, tb=1024):
    """x: [B, 784] float32. params: w1..w4 bf16 [in,out], b1..b4 f32 [1,out].

    Returns float32 [B, 10] sigmoid outputs.
    """
    B = x.shape[0]
    TB, B_pad = _choose_tile(B, tb)
    n_tiles = B_pad // TB

    x_in = x.astype(jnp.float32)
    if B_pad != B:
        # Only hit when no exact-divisor tile exists; pads the tail rows with zeros.
        x_in = jnp.pad(x_in, ((0, B_pad - B), (0, 0)))

    # Zero-pad the last layer to 128 output lanes (lane-dense output block).
    pad_n = OUT_PAD - OUTPUT_SIZE
    w4p = jnp.pad(params["w4"], ((0, 0), (0, pad_n)))
    b4p = jnp.pad(params["b4"], ((0, 0), (0, pad_n)))

    weights = (params["w1"], params["b1"],
               params["w2"], params["b2"],
               params["w3"], params["b3"],
               w4p, b4p)

    # x / out tiled over batch; weights & biases use constant block indices so the
    # pipeline keeps them VMEM-resident across grid steps (no per-step re-DMA).
    # NOTE: bind `a` via a default arg to avoid the late-binding lambda bug.
    in_specs = [pl.BlockSpec((TB, INPUT_SIZE), lambda i: (i, 0))]
    in_specs += [pl.BlockSpec(a.shape, lambda i, a=a: (0,) * a.ndim) for a in weights]
    out_spec = pl.BlockSpec((TB, OUT_PAD), lambda i: (i, 0))

    # Advisory cost hint for the surrounding XLA graph.
    mac = INPUT_SIZE * H1 + H1 * H2 + H2 * H3 + H3 * OUT_PAD
    weight_bytes = 2 * mac + 4 * (H1 + H2 + H3 + OUT_PAD)
    cost = pl.CostEstimate(
        flops=2 * B_pad * mac,
        transcendentals=B_pad * OUT_PAD,              # sigmoid
        bytes_accessed=weight_bytes + B_pad * (4 * INPUT_SIZE + 4 * OUT_PAD),
    )

    out = pl.pallas_call(
        _mlp_kernel,
        out_shape=jax.ShapeDtypeStruct((B_pad, OUT_PAD), jnp.float32),
        grid=(n_tiles,),
        in_specs=in_specs,
        out_specs=out_spec,
        compiler_params=pltpu.CompilerParams(
            dimension_semantics=("parallel",)),
        cost_estimate=cost,
    )(x_in, *weights)

    return out[:B, :OUTPUT_SIZE]


def init_params(key):
    """Deterministic init mimicking nn.Linear (weights stored transposed, bf16)."""
    sizes = [(INPUT_SIZE, H1), (H1, H2), (H2, H3), (H3, OUTPUT_SIZE)]
    params = {}
    keys = jax.random.split(key, 2 * len(sizes))
    for i, (fan_in, fan_out) in enumerate(sizes):
        bound = 1.0 / jnp.sqrt(fan_in)
        w = jax.random.uniform(keys[2 * i], (fan_in, fan_out),
                               minval=-bound, maxval=bound, dtype=jnp.float32)
        b = jax.random.uniform(keys[2 * i + 1], (1, fan_out),
                               minval=-bound, maxval=bound, dtype=jnp.float32)
        params[f"w{i + 1}"] = w.astype(jnp.bfloat16)
        params[f"b{i + 1}"] = b
    return params


def _reference_forward(x, params):
    """Pure-JAX reference (same bf16 weights, f32 math) for a correctness check."""
    h = x.astype(jnp.float32)
    for i in range(1, 5):
        w = params[f"w{i}"].astype(jnp.float32)
        b = params[f"b{i}"]
        h = h @ w + b
        h = jnp.maximum(h, 0.0) if i < 4 else jax.nn.sigmoid(h)
    return h


if __name__ == "__main__":
    key = jax.random.PRNGKey(0)
    pkey, xkey = jax.random.split(key)
    params = init_params(pkey)

    B = 8
    x = jax.random.normal(xkey, (B, INPUT_SIZE), dtype=jnp.float32)

    out = net_forward(x, params)
    out = jax.block_until_ready(out)

    # sanity: shape, sigmoid range, and agreement with pure-JAX reference
    assert out.shape == (B, OUTPUT_SIZE)
    assert bool(jnp.all(out > 0.0)) and bool(jnp.all(out < 1.0))
    ref = _reference_forward(x, params)
    assert bool(jnp.allclose(out, ref, atol=3e-2)), "mismatch vs reference"

    print("KERNEL_OK")
</pallas_src>

<mosaic_0001>
module attributes {stable_mosaic.version = 11 : i64} {
  func.func @_mlp_kernel(%arg0: i32, %arg1: memref<8x784xf32, #tpu.memory_space<vmem>>, %arg2: memref<784x512xbf16, #tpu.memory_space<vmem>>, %arg3: memref<1x512xf32, #tpu.memory_space<vmem>>, %arg4: memref<512x256xbf16, #tpu.memory_space<vmem>>, %arg5: memref<1x256xf32, #tpu.memory_space<vmem>>, %arg6: memref<256x128xbf16, #tpu.memory_space<vmem>>, %arg7: memref<1x128xf32, #tpu.memory_space<vmem>>, %arg8: memref<128x128xbf16, #tpu.memory_space<vmem>>, %arg9: memref<1x128xf32, #tpu.memory_space<vmem>>, %arg10: memref<8x128xf32, #tpu.memory_space<vmem>>) attributes {dimension_semantics = [#tpu.dimension_semantics<parallel>], iteration_bounds = array<i64: 1>, scalar_prefetch = 0 : i64, scratch_operands = 0 : i64, tpu.core_type = #tpu.core_type<tc>, window_params = [{transform_indices = @transform_0, window_bounds = array<i64: 8, 784>}, {pipeline_mode = #tpu.pipeline_mode<synchronous>, transform_indices = @transform_1, window_bounds = array<i64: 784, 512>}, {pipeline_mode = #tpu.pipeline_mode<synchronous>, transform_indices = @transform_2, window_bounds = array<i64: 1, 512>}, {pipeline_mode = #tpu.pipeline_mode<synchronous>, transform_indices = @transform_3, window_bounds = array<i64: 512, 256>}, {pipeline_mode = #tpu.pipeline_mode<synchronous>, transform_indices = @transform_4, window_bounds = array<i64: 1, 256>}, {pipeline_mode = #tpu.pipeline_mode<synchronous>, transform_indices = @transform_5, window_bounds = array<i64: 256, 128>}, {pipeline_mode = #tpu.pipeline_mode<synchronous>, transform_indices = @transform_6, window_bounds = array<i64: 1, 128>}, {pipeline_mode = #tpu.pipeline_mode<synchronous>, transform_indices = @transform_7, window_bounds = array<i64: 128, 128>}, {pipeline_mode = #tpu.pipeline_mode<synchronous>, transform_indices = @transform_8, window_bounds = array<i64: 1, 128>}, {transform_indices = @transform_9, window_bounds = array<i64: 8, 128>}]} {
    %c0 = arith.constant 0 : index
    %c0_0 = arith.constant 0 : index
    %0 = vector.load %arg1[%c0, %c0_0] : memref<8x784xf32, #tpu.memory_space<vmem>>, vector<8x784xf32>
    %1 = arith.truncf %0 : vector<8x784xf32> to vector<8x784xbf16>
    %c0_1 = arith.constant 0 : index
    %c0_2 = arith.constant 0 : index
    %2 = vector.load %arg2[%c0_1, %c0_2] : memref<784x512xbf16, #tpu.memory_space<vmem>>, vector<784x512xbf16>
    %cst = arith.constant dense<0.000000e+00> : vector<8x512xf32>
    %3 = tpu.matmul %1, %2, %cst {dimension_numbers = #tpu.dot_dimension_numbers<[1], [0], [0], [1], [0, 0, 1, 1], [], []>} : vector<8x784xbf16>, vector<784x512xbf16>, vector<8x512xf32> -> vector<8x512xf32>
    %c0_3 = arith.constant 0 : index
    %c0_4 = arith.constant 0 : index
    %4 = vector.load %arg3[%c0_3, %c0_4] : memref<1x512xf32, #tpu.memory_space<vmem>>, vector<1x512xf32>
    %5 = vector.broadcast %4 : vector<1x512xf32> to vector<8x512xf32>
    %6 = arith.addf %3, %5 : vector<8x512xf32>
    %cst_5 = arith.constant 0.000000e+00 : f32
    %7 = vector.broadcast %cst_5 : f32 to vector<8x512xf32>
    %8 = arith.maximumf %6, %7 : vector<8x512xf32>
    %9 = arith.truncf %8 : vector<8x512xf32> to vector<8x512xbf16>
    %c0_6 = arith.constant 0 : index
    %c0_7 = arith.constant 0 : index
    %10 = vector.load %arg4[%c0_6, %c0_7] : memref<512x256xbf16, #tpu.memory_space<vmem>>, vector<512x256xbf16>
    %cst_8 = arith.constant dense<0.000000e+00> : vector<8x256xf32>
    %11 = tpu.matmul %9, %10, %cst_8 {dimension_numbers = #tpu.dot_dimension_numbers<[1], [0], [0], [1], [0, 0, 1, 1], [], []>} : vector<8x512xbf16>, vector<512x256xbf16>, vector<8x256xf32> -> vector<8x256xf32>
    %c0_9 = arith.constant 0 : index
    %c0_10 = arith.constant 0 : index
    %12 = vector.load %arg5[%c0_9, %c0_10] : memref<1x256xf32, #tpu.memory_space<vmem>>, vector<1x256xf32>
    %13 = vector.broadcast %12 : vector<1x256xf32> to vector<8x256xf32>
    %14 = arith.addf %11, %13 : vector<8x256xf32>
    %cst_11 = arith.constant 0.000000e+00 : f32
    %15 = vector.broadcast %cst_11 : f32 to vector<8x256xf32>
    %16 = arith.maximumf %14, %15 : vector<8x256xf32>
    %17 = arith.truncf %16 : vector<8x256xf32> to vector<8x256xbf16>
    %c0_12 = arith.constant 0 : index
    %c0_13 = arith.constant 0 : index
    %18 = vector.load %arg6[%c0_12, %c0_13] : memref<256x128xbf16, #tpu.memory_space<vmem>>, vector<256x128xbf16>
    %cst_14 = arith.constant dense<0.000000e+00> : vector<8x128xf32>
    %19 = tpu.matmul %17, %18, %cst_14 {dimension_numbers = #tpu.dot_dimension_numbers<[1], [0], [0], [1], [0, 0, 1, 1], [], []>} : vector<8x256xbf16>, vector<256x128xbf16>, vector<8x128xf32> -> vector<8x128xf32>
    %c0_15 = arith.constant 0 : index
    %c0_16 = arith.constant 0 : index
    %20 = vector.load %arg7[%c0_15, %c0_16] : memref<1x128xf32, #tpu.memory_space<vmem>>, vector<1x128xf32>
    %21 = vector.broadcast %20 : vector<1x128xf32> to vector<8x128xf32>
    %22 = arith.addf %19, %21 : vector<8x128xf32>
    %cst_17 = arith.constant 0.000000e+00 : f32
    %23 = vector.broadcast %cst_17 : f32 to vector<8x128xf32>
    %24 = arith.maximumf %22, %23 : vector<8x128xf32>
    %25 = arith.truncf %24 : vector<8x128xf32> to vector<8x128xbf16>
    %c0_18 = arith.constant 0 : index
    %c0_19 = arith.constant 0 : index
    %26 = vector.load %arg8[%c0_18, %c0_19] : memref<128x128xbf16, #tpu.memory_space<vmem>>, vector<128x128xbf16>
    %cst_20 = arith.constant dense<0.000000e+00> : vector<8x128xf32>
    %27 = tpu.matmul %25, %26, %cst_20 {dimension_numbers = #tpu.dot_dimension_numbers<[1], [0], [0], [1], [0, 0, 1, 1], [], []>} : vector<8x128xbf16>, vector<128x128xbf16>, vector<8x128xf32> -> vector<8x128xf32>
    %c0_21 = arith.constant 0 : index
    %c0_22 = arith.constant 0 : index
    %28 = vector.load %arg9[%c0_21, %c0_22] : memref<1x128xf32, #tpu.memory_space<vmem>>, vector<1x128xf32>
    %29 = vector.broadcast %28 : vector<1x128xf32> to vector<8x128xf32>
    %30 = arith.addf %27, %29 : vector<8x128xf32>
    %31 = arith.negf %30 : vector<8x128xf32>
    %32 = math.exp %31 : vector<8x128xf32>
    %cst_23 = arith.constant 1.000000e+00 : f32
    %33 = vector.broadcast %cst_23 : f32 to vector<8x128xf32>
    %34 = arith.addf %33, %32 : vector<8x128xf32>
    %35 = arith.divf %33, %34 : vector<8x128xf32>
    %c0_24 = arith.constant 0 : index
    %c0_25 = arith.constant 0 : index
    %36 = vector.load %arg10[%c0_24, %c0_25] : memref<8x128xf32, #tpu.memory_space<vmem>>, vector<8x128xf32>
    tpu.vector_store %arg10[%c0_24, %c0_25], %35 {strides = array<i32>} : memref<8x128xf32, #tpu.memory_space<vmem>>, vector<8x128xf32>,
    return
  }
  func.func @transform_0(%arg0: i32) -> (i32, i32) {
    %c0_i32 = arith.constant 0 : i32
    %c0_i32_0 = arith.constant 0 : i32
    return %arg0, %c0_i32 : i32, i32
  }
  func.func @transform_1(%arg0: i32) -> (i32, i32) {
    %c0_i32 = arith.constant 0 : i32
    %c0_i32_0 = arith.constant 0 : i32
    %c0_i32_1 = arith.constant 0 : i32
    return %c0_i32, %c0_i32_0 : i32, i32
  }
  func.func @transform_2(%arg0: i32) -> (i32, i32) {
    %c0_i32 = arith.constant 0 : i32
    %c0_i32_0 = arith.constant 0 : i32
    %c0_i32_1 = arith.constant 0 : i32
    return %c0_i32, %c0_i32_0 : i32, i32
  }
  func.func @transform_3(%arg0: i32) -> (i32, i32) {
    %c0_i32 = arith.constant 0 : i32
    %c0_i32_0 = arith.constant 0 : i32
    %c0_i32_1 = arith.constant 0 : i32
    return %c0_i32, %c0_i32_0 : i32, i32
  }
  func.func @transform_4(%arg0: i32) -> (i32, i32) {
    %c0_i32 = arith.constant 0 : i32
    %c0_i32_0 = arith.constant 0 : i32
    %c0_i32_1 = arith.constant 0 : i32
    return %c0_i32, %c0_i32_0 : i32, i32
  }
  func.func @transform_5(%arg0: i32) -> (i32, i32) {
    %c0_i32 = arith.constant 0 : i32
    %c0_i32_0 = arith.constant 0 : i32
    %c0_i32_1 = arith.constant 0 : i32
    return %c0_i32, %c0_i32_0 : i32, i32
  }
  func.func @transform_6(%arg0: i32) -> (i32, i32) {
    %c0_i32 = arith.constant 0 : i32
    %c0_i32_0 = arith.constant 0 : i32
    %c0_i32_1 = arith.constant 0 : i32
    return %c0_i32, %c0_i32_0 : i32, i32
  }
  func.func @transform_7(%arg0: i32) -> (i32, i32) {
    %c0_i32 = arith.constant 0 : i32
    %c0_i32_0 = arith.constant 0 : i32
    %c0_i32_1 = arith.constant 0 : i32
    return %c0_i32, %c0_i32_0 : i32, i32
  }
  func.func @transform_8(%arg0: i32) -> (i32, i32) {
    %c0_i32 = arith.constant 0 : i32
    %c0_i32_0 = arith.constant 0 : i32
    %c0_i32_1 = arith.constant 0 : i32
    return %c0_i32, %c0_i32_0 : i32, i32
  }
  func.func @transform_9(%arg0: i32) -> (i32, i32) {
    %c0_i32 = arith.constant 0 : i32
    %c0_i32_0 = arith.constant 0 : i32
    return %arg0, %c0_i32 : i32, i32
  }
}

</mosaic_0001>

<llo_original>
// kernel: tpu_custom_call.1
$region0: #{tpu_custom_call.1}
  #allocation0 [shape = 'u32[]', space=smem, size = 0x4, offset = 0x4, fixed_abs, tag = 'smem constant byte address 0x4 - core index']
  #allocation1 [shape = 'u32[144,128]{1,0:T(1,128)}', space=vmem, size = 0x12000, scoped, tag = 'internal scratch']
  %s0 = inlined_call_operand.hbm [shape: f32[8,784], index: 0, kind: input, shape index: {}]
  %s1 = inlined_call_operand.hbm [shape: bf16[784,512], index: 1, kind: input, shape index: {}]
  %s2 = inlined_call_operand.hbm [shape: f32[1,512], index: 2, kind: input, shape index: {}]
  %s3 = inlined_call_operand.hbm [shape: bf16[512,256], index: 3, kind: input, shape index: {}]
  %s4 = inlined_call_operand.vmem [shape: f32[1,256], index: 4, kind: input, shape index: {}]
  %s5 = inlined_call_operand.hbm [shape: bf16[256,128], index: 5, kind: input, shape index: {}]
  %s6 = inlined_call_operand.vmem [shape: f32[1,128], index: 6, kind: input, shape index: {}]
  %s7 = inlined_call_operand.hbm [shape: bf16[128,128], index: 7, kind: input, shape index: {}]
  %s8 = inlined_call_operand.vmem [shape: f32[1,128], index: 8, kind: input, shape index: {}]
  %s9 = inlined_call_operand.hbm [shape: f32[8,128], index: 9, kind: output, shape index: {}]
  %s10 = sld [smem:[#allocation0]]
  $region70: #{tpu_custom_call.1} parent=0
    _
  %s12 = ssub.s32 1, %s10
  %s13 = scalar_select 0, %s12, %s10
  $region1: #{tpu_custom_call.1} parent=0
    #allocation2 [shape = 'u8[28672]{0}', space=vmem, size = 0x7000, scoped, tag = 'input window, operand 0, single buffered']
    #allocation3 [shape = 's32[1]{0}', space=sflag, size = 0x4, scoped, tag = 'scoped memory for tpu_custom_call.1']
    #allocation4 [shape = 's32[1]{0}', space=sflag, size = 0x4, scoped, tag = 'scoped memory for tpu_custom_call.1']
    #allocation5 [shape = 'u8[802816]{0}', space=vmem, size = 0xc4000, scoped, tag = 'input window, operand 1, single buffered']
    #allocation6 [shape = 's32[1]{0}', space=sflag, size = 0x4, scoped, tag = 'scoped memory for tpu_custom_call.1']
    #allocation7 [shape = 'u8[2048]{0}', space=vmem, size = 0x800, scoped, tag = 'input window, operand 2, single buffered']
    #allocation8 [shape = 'u8[262144]{0}', space=vmem, size = 0x40000, scoped, tag = 'input window, operand 3, single buffered']
    #allocation9 [shape = 's32[1]{0}', space=sflag, size = 0x4, scoped, tag = 'scoped memory for tpu_custom_call.1']
    #allocation10 [shape = 'u8[65536]{0}', space=vmem, size = 0x10000, scoped, tag = 'input window, operand 5, single buffered']
    #allocation11 [shape = 'u8[32768]{0}', space=vmem, size = 0x8000, scoped, tag = 'input window, operand 7, single buffered']
    #allocation12 [shape = 's32[1]{0}', space=sflag, size = 0x4, scoped, tag = 'scoped memory for tpu_custom_call.1']
    #allocation13 [shape = 'u8[4096]{0}', space=vmem, size = 0x1000, scoped, tag = 'output window, operand 0, single buffered']
    %14 = vsyncpa [#allocation3], 0
    %15 = vsyncpa [#allocation6], 0
    %16 = vsyncpa [#allocation9], 0
    %17 = vsyncpa [#allocation12], 0
    %18 = vsyncpa [#allocation4], 0
    // Predicated region
    $region2: #{tpu_custom_call.1} parent=1 // pred_check
      _
    $region3: #{tpu_custom_call.1} parent=1 // pred_check_branch
      %20 = sbr.rel (0) target = $region5
    $region4: #{tpu_custom_call.1} parent=1 // pred_region
      %s22 = ssub.s32 896, 896
      %23 = vsyncadd [#allocation3], %s22
      %s25 = sshll.u32 [#allocation2], 4
      %s26 = int_to_ptr.vmem [resolvable:$true] %s25
      %28 = dma.hbm_to_vmem [thread:$0]  %s0, 896, %s26, [#allocation3]
    $region5: #{tpu_custom_call.1} parent=1 // pred_fallthru
      _
    // Predicated region
    $region6: #{tpu_custom_call.1} parent=1 // pred_check
      _
    $region7: #{tpu_custom_call.1} parent=1 // pred_check_branch
      %30 = sbr.rel (0) target = $region9
    $region8: #{tpu_custom_call.1} parent=1 // pred_region
      %s32 = ssub.s32 25088, 25088
      %33 = vsyncadd [#allocation6], %s32
      %s34 = sshll.u32 [#allocation5], 4
      %s35 = int_to_ptr.vmem [resolvable:$true] %s34
      %40 = dma.hbm_to_vmem [thread:$0]  %s1, 25088, %s35, [#allocation6], 256, 256, 16
    $region9: #{tpu_custom_call.1} parent=1 // pred_fallthru
      _
    // Predicated region
    $region10: #{tpu_custom_call.1} parent=1 // pred_check
      _
    $region11: #{tpu_custom_call.1} parent=1 // pred_check_branch
      %42 = sbr.rel (0) target = $region13
    $region12: #{tpu_custom_call.1} parent=1 // pred_region
      %s44 = ssub.s32 64, 64
      %45 = vsyncadd [#allocation6], %s44
      %s47 = sshll.u32 [#allocation7], 4
      %s48 = int_to_ptr.vmem [resolvable:$true] %s47
      %50 = dma.hbm_to_vmem [thread:$0]  %s2, 64, %s48, [#allocation6]
    $region13: #{tpu_custom_call.1} parent=1 // pred_fallthru
      _
    // Predicated region
    $region14: #{tpu_custom_call.1} parent=1 // pred_check
      _
    $region15: #{tpu_custom_call.1} parent=1 // pred_check_branch
      %52 = sbr.rel (0) target = $region17
    $region16: #{tpu_custom_call.1} parent=1 // pred_region
      %s54 = ssub.s32 8192, 8192
      %55 = vsyncadd [#allocation9], %s54
      %s56 = sshll.u32 [#allocation8], 4
      %s57 = int_to_ptr.vmem [resolvable:$true] %s56
      %62 = dma.hbm_to_vmem [thread:$0]  %s3, 8192, %s57, [#allocation9], 128, 128, 8
    $region17: #{tpu_custom_call.1} parent=1 // pred_fallthru
      _
    // Predicated region
    $region18: #{tpu_custom_call.1} parent=1 // pred_check
      _
    $region19: #{tpu_custom_call.1} parent=1 // pred_check_branch
      %64 = sbr.rel (0) target = $region21
    $region20: #{tpu_custom_call.1} parent=1 // pred_region
      _
    $region21: #{tpu_custom_call.1} parent=1 // pred_fallthru
      _
    // Predicated region
    $region22: #{tpu_custom_call.1} parent=1 // pred_check
      _
    $region23: #{tpu_custom_call.1} parent=1 // pred_check_branch
      %66 = sbr.rel (0) target = $region25
    $region24: #{tpu_custom_call.1} parent=1 // pred_region
      %s68 = ssub.s32 2048, 2048
      %69 = vsyncadd [#allocation9], %s68
      %s70 = sshll.u32 [#allocation10], 4
      %s71 = int_to_ptr.vmem [resolvable:$true] %s70
      %76 = dma.hbm_to_vmem [thread:$0]  %s5, 2048, %s71, [#allocation9], 64, 64, 4
    $region25: #{tpu_custom_call.1} parent=1 // pred_fallthru
      _
    // Predicated region
    $region26: #{tpu_custom_call.1} parent=1 // pred_check
      _
    $region27: #{tpu_custom_call.1} parent=1 // pred_check_branch
      %78 = sbr.rel (0) target = $region29
    $region28: #{tpu_custom_call.1} parent=1 // pred_region
      _
    $region29: #{tpu_custom_call.1} parent=1 // pred_fallthru
      _
    // Predicated region
    $region30: #{tpu_custom_call.1} parent=1 // pred_check
      _
    $region31: #{tpu_custom_call.1} parent=1 // pred_check_branch
      %80 = sbr.rel (0) target = $region33
    $region32: #{tpu_custom_call.1} parent=1 // pred_region
      %s82 = ssub.s32 1024, 1024
      %83 = vsyncadd [#allocation12], %s82
      %s84 = sshll.u32 [#allocation11], 4
      %s85 = int_to_ptr.vmem [resolvable:$true] %s84
      %90 = dma.hbm_to_vmem [thread:$0]  %s7, 1024, %s85, [#allocation12], 64, 64, 4
    $region33: #{tpu_custom_call.1} parent=1 // pred_fallthru
      _
    // Predicated region
    $region34: #{tpu_custom_call.1} parent=1 // pred_check
      _
    $region35: #{tpu_custom_call.1} parent=1 // pred_check_branch
      %92 = sbr.rel (0) target = $region37
    $region36: #{tpu_custom_call.1} parent=1 // pred_region
      _
    $region37: #{tpu_custom_call.1} parent=1 // pred_fallthru
      _
    // Predicated region
    $region38: #{tpu_custom_call.1} parent=1 // pred_check
      _
    $region39: #{tpu_custom_call.1} parent=1 // pred_check_branch
      %94 = sbr.rel (0) target = $region41
    $region40: #{tpu_custom_call.1} parent=1 // pred_region
      %95 = dma.done [#allocation3], 896
    $region41: #{tpu_custom_call.1} parent=1 // pred_fallthru
      _
    // Predicated region
    $region42: #{tpu_custom_call.1} parent=1 // pred_check
      _
    $region43: #{tpu_custom_call.1} parent=1 // pred_check_branch
      %97 = sbr.rel (0) target = $region45
    $region44: #{tpu_custom_call.1} parent=1 // pred_region
      %98 = dma.done [#allocation6], 25088
    $region45: #{tpu_custom_call.1} parent=1 // pred_fallthru
      _
    // Predicated region
    $region46: #{tpu_custom_call.1} parent=1 // pred_check
      _
    $region47: #{tpu_custom_call.1} parent=1 // pred_check_branch
      %100 = sbr.rel (0) target = $region49
    $region48: #{tpu_custom_call.1} parent=1 // pred_region
      %101 = dma.done [#allocation6], 64
    $region49: #{tpu_custom_call.1} parent=1 // pred_fallthru
      _
    // Predicated region
    $region50: #{tpu_custom_call.1} parent=1 // pred_check
      _
    $region51: #{tpu_custom_call.1} parent=1 // pred_check_branch
      %103 = sbr.rel (0) target = $region53
    $region52: #{tpu_custom_call.1} parent=1 // pred_region
      %104 = dma.done [#allocation9], 8192
    $region53: #{tpu_custom_call.1} parent=1 // pred_fallthru
      _
    // Predicated region
    $region54: #{tpu_custom_call.1} parent=1 // pred_check
      _
    $region55: #{tpu_custom_call.1} parent=1 // pred_check_branch
      %106 = sbr.rel (0) target = $region57
    $region56: #{tpu_custom_call.1} parent=1 // pred_region
      %107 = dma.done [#allocation9], 2048
    $region57: #{tpu_custom_call.1} parent=1 // pred_fallthru
      _
    // Predicated region
    $region58: #{tpu_custom_call.1} parent=1 // pred_check
      _
    $region59: #{tpu_custom_call.1} parent=1 // pred_check_branch
      %109 = sbr.rel (0) target = $region61
    $region60: #{tpu_custom_call.1} parent=1 // pred_region
      %110 = dma.done [#allocation12], 1024
    $region61: #{tpu_custom_call.1} parent=1 // pred_fallthru
      _
    %v112 = vld [vmem:[#allocation2] sm:$0xff]
    %v113 = vld [vmem:[#allocation2 + $0x8] sm:$0xff]
    %v114 = vld [vmem:[#allocation2 + $0x10] sm:$0xff]
    %v115 = vld [vmem:[#allocation2 + $0x18] sm:$0xff]
    %v116 = vld [vmem:[#allocation2 + $0x20] sm:$0xff]
    %v117 = vld [vmem:[#allocation2 + $0x28] sm:$0xff]
    %v118 = vld [vmem:[#allocation2 + $0x30] sm:$0xff]
    %v119 = vpack.c.bf16 %v112, %v112
    %v120 = vpack.c.bf16 %v113, %v113
    %v121 = vpack.c.bf16 %v114, %v114
    %v122 = vpack.c.bf16 %v115, %v115
    %v123 = vpack.c.bf16 %v116, %v116
    %v124 = vpack.c.bf16 %v117, %v117
    %v125 = vpack.c.bf16 %v118, %v118
    %v126 = vld [vmem:[#allocation5] sm:$0xff]
    %v127 = vld [vmem:[#allocation5 + $0x8] sm:$0xff]
    %v128 = vld [vmem:[#allocation5 + $0x10] sm:$0xff]
    %v129 = vld [vmem:[#allocation5 + $0x18] sm:$0xff]
    %v130 = vld [vmem:[#allocation5 + $0x20] sm:$0xff]
    %v131 = vld [vmem:[#allocation5 + $0x28] sm:$0xff]
    %v132 = vld [vmem:[#allocation5 + $0x30] sm:$0xff]
    %v133 = vld [vmem:[#allocation5 + $0x38] sm:$0xff]
    %v134 = vld [vmem:[#allocation5 + $0x40] sm:$0xff]
    %v135 = vld [vmem:[#allocation5 + $0x48] sm:$0xff]
    %v136 = vld [vmem:[#allocation5 + $0x50] sm:$0xff]
    %v137 = vld [vmem:[#allocation5 + $0x58] sm:$0xff]
    %v138 = vld [vmem:[#allocation5 + $0x60] sm:$0xff]
    %v139 = vld [vmem:[#allocation5 + $0x68] sm:$0xff]
    %v140 = vld [vmem:[#allocation5 + $0x70] sm:$0xff]
    %v141 = vld [vmem:[#allocation5 + $0x78] sm:$0xff]
    %v142 = vld [vmem:[#allocation5 + $0x80] sm:$0xff]
    %v143 = vld [vmem:[#allocation5 + $0x88] sm:$0xff]
    %v144 = vld [vmem:[#allocation5 + $0x90] sm:$0xff]
    %v145 = vld [vmem:[#allocation5 + $0x98] sm:$0xff]
    %v146 = vld [vmem:[#allocation5 + $0xa0] sm:$0xff]
    %v147 = vld [vmem:[#allocation5 + $0xa8] sm:$0xff]
    %v148 = vld [vmem:[#allocation5 + $0xb0] sm:$0xff]
    %v149 = vld [vmem:[#allocation5 + $0xb8] sm:$0xff]
    %v150 = vld [vmem:[#allocation5 + $0xc0] sm:$0xff]
    %v151 = vld [vmem:[#allocation5 + $0xc8] sm:$0xff]
    %v152 = vld [vmem:[#allocation5 + $0xd0] sm:$0xff]
    %v153 = vld [vmem:[#allocation5 + $0xd8] sm:$0xff]
    %v154 = vld [vmem:[#allocation5 + $0xe0] sm:$0xff]
    %v155 = vld [vmem:[#allocation5 + $0xe8] sm:$0xff]
    %v156 = vld [vmem:[#allocation5 + $0xf0] sm:$0xff]
    %v157 = vld [vmem:[#allocation5 + $0xf8] sm:$0xff]
    %v158 = vld [vmem:[#allocation5 + $0x100] sm:$0xff]
    %v159 = vld [vmem:[#allocation5 + $0x108] sm:$0xff]
    %v160 = vld [vmem:[#allocation5 + $0x110] sm:$0xff]
    %v161 = vld [vmem:[#allocation5 + $0x118] sm:$0xff]
    %v162 = vld [vmem:[#allocation5 + $0x120] sm:$0xff]
    %v163 = vld [vmem:[#allocation5 + $0x128] sm:$0xff]
    %v164 = vld [vmem:[#allocation5 + $0x130] sm:$0xff]
    %v165 = vld [vmem:[#allocation5 + $0x138] sm:$0xff]
    %v166 = vld [vmem:[#allocation5 + $0x140] sm:$0xff]
    %v167 = vld [vmem:[#allocation5 + $0x148] sm:$0xff]
    %v168 = vld [vmem:[#allocation5 + $0x150] sm:$0xff]
    %v169 = vld [vmem:[#allocation5 + $0x158] sm:$0xff]
    %v170 = vld [vmem:[#allocation5 + $0x160] sm:$0xff]
    %v171 = vld [vmem:[#allocation5 + $0x168] sm:$0xff]
    %v172 = vld [vmem:[#allocation5 + $0x170] sm:$0xff]
    %v173 = vld [vmem:[#allocation5 + $0x178] sm:$0xff]
    %v174 = vld [vmem:[#allocation5 + $0x180] sm:$0xff]
    %v175 = vld [vmem:[#allocation5 + $0x188] sm:$0xff]
    %v176 = vld [vmem:[#allocation5 + $0x190] sm:$0xff]
    %v177 = vld [vmem:[#allocation5 + $0x198] sm:$0xff]
    %v178 = vld [vmem:[#allocation5 + $0x1a0] sm:$0xff]
    %v179 = vld [vmem:[#allocation5 + $0x1a8] sm:$0xff]
    %v180 = vld [vmem:[#allocation5 + $0x1b0] sm:$0xff]
    %v181 = vld [vmem:[#allocation5 + $0x1b8] sm:$0xff]
    %v182 = vld [vmem:[#allocation5 + $0x1c0] sm:$0xff]
    %v183 = vld [vmem:[#allocation5 + $0x1c8] sm:$0xff]
    %v184 = vld [vmem:[#allocation5 + $0x1d0] sm:$0xff]
    %v185 = vld [vmem:[#allocation5 + $0x1d8] sm:$0xff]
    %v186 = vld [vmem:[#allocation5 + $0x1e0] sm:$0xff]
    %v187 = vld [vmem:[#allocation5 + $0x1e8] sm:$0xff]
    %v188 = vld [vmem:[#allocation5 + $0x1f0] sm:$0xff]
    %v189 = vld [vmem:[#allocation5 + $0x1f8] sm:$0xff]
    %v190 = vld [vmem:[#allocation5 + $0x200] sm:$0xff]
    %v191 = vld [vmem:[#allocation5 + $0x208] sm:$0xff]
    %v192 = vld [vmem:[#allocation5 + $0x210] sm:$0xff]
    %v193 = vld [vmem:[#allocation5 + $0x218] sm:$0xff]
    %v194 = vld [vmem:[#allocation5 + $0x220] sm:$0xff]
    %v195 = vld [vmem:[#allocation5 + $0x228] sm:$0xff]
    %v196 = vld [vmem:[#allocation5 + $0x230] sm:$0xff]
    %v197 = vld [vmem:[#allocation5 + $0x238] sm:$0xff]
    %v198 = vld [vmem:[#allocation5 + $0x240] sm:$0xff]
    %v199 = vld [vmem:[#allocation5 + $0x248] sm:$0xff]
    %v200 = vld [vmem:[#allocation5 + $0x250] sm:$0xff]
    %v201 = vld [vmem:[#allocation5 + $0x258] sm:$0xff]
    %v202 = vld [vmem:[#allocation5 + $0x260] sm:$0xff]
    %v203 = vld [vmem:[#allocation5 + $0x268] sm:$0xff]
    %v204 = vld [vmem:[#allocation5 + $0x270] sm:$0xff]
    %v205 = vld [vmem:[#allocation5 + $0x278] sm:$0xff]
    %v206 = vld [vmem:[#allocation5 + $0x280] sm:$0xff]
    %v207 = vld [vmem:[#allocation5 + $0x288] sm:$0xff]
    %v208 = vld [vmem:[#allocation5 + $0x290] sm:$0xff]
    %v209 = vld [vmem:[#allocation5 + $0x298] sm:$0xff]
    %v210 = vld [vmem:[#allocation5 + $0x2a0] sm:$0xff]
    %v211 = vld [vmem:[#allocation5 + $0x2a8] sm:$0xff]
    %v212 = vld [vmem:[#allocation5 + $0x2b0] sm:$0xff]
    %v213 = vld [vmem:[#allocation5 + $0x2b8] sm:$0xff]
    %v214 = vld [vmem:[#allocation5 + $0x2c0] sm:$0xff]
    %v215 = vld [vmem:[#allocation5 + $0x2c8] sm:$0xff]
    %v216 = vld [vmem:[#allocation5 + $0x2d0] sm:$0xff]
    %v217 = vld [vmem:[#allocation5 + $0x2d8] sm:$0xff]
    %v218 = vld [vmem:[#allocation5 + $0x2e0] sm:$0xff]
    %v219 = vld [vmem:[#allocation5 + $0x2e8] sm:$0xff]
    %v220 = vld [vmem:[#allocation5 + $0x2f0] sm:$0xff]
    %v221 = vld [vmem:[#allocation5 + $0x2f8] sm:$0xff]
    %v222 = vld [vmem:[#allocation5 + $0x300] sm:$0xff]
    %v223 = vld [vmem:[#allocation5 + $0x308] sm:$0xff]
    %v224 = vld [vmem:[#allocation5 + $0x310] sm:$0xff]
    %v225 = vld [vmem:[#allocation5 + $0x318] sm:$0xff]
    %v226 = vld [vmem:[#allocation5 + $0x320] sm:$0xff]
    %v227 = vld [vmem:[#allocation5 + $0x328] sm:$0xff]
    %v228 = vld [vmem:[#allocation5 + $0x330] sm:$0xff]
    %v229 = vld [vmem:[#allocation5 + $0x338] sm:$0xff]
    %v230 = vld [vmem:[#allocation5 + $0x340] sm:$0xff]
    %v231 = vld [vmem:[#allocation5 + $0x348] sm:$0xff]
    %v232 = vld [vmem:[#allocation5 + $0x350] sm:$0xff]
    %v233 = vld [vmem:[#allocation5 + $0x358] sm:$0xff]
    %v234 = vld [vmem:[#allocation5 + $0x360] sm:$0xff]
    %v235 = vld [vmem:[#allocation5 + $0x368] sm:$0xff]
    %v236 = vld [vmem:[#allocation5 + $0x370] sm:$0xff]
    %v237 = vld [vmem:[#allocation5 + $0x378] sm:$0xff]
    %v238 = vld [vmem:[#allocation5 + $0x380] sm:$0xff]
    %v239 = vld [vmem:[#allocation5 + $0x388] sm:$0xff]
    %v240 = vld [vmem:[#allocation5 + $0x390] sm:$0xff]
    %v241 = vld [vmem:[#allocation5 + $0x398] sm:$0xff]
    %v242 = vld [vmem:[#allocation5 + $0x3a0] sm:$0xff]
    %v243 = vld [vmem:[#allocation5 + $0x3a8] sm:$0xff]
    %v244 = vld [vmem:[#allocation5 + $0x3b0] sm:$0xff]
    %v245 = vld [vmem:[#allocation5 + $0x3b8] sm:$0xff]
    %v246 = vld [vmem:[#allocation5 + $0x3c0] sm:$0xff]
    %v247 = vld [vmem:[#allocation5 + $0x3c8] sm:$0xff]
    %v248 = vld [vmem:[#allocation5 + $0x3d0] sm:$0xff]
    %v249 = vld [vmem:[#allocation5 + $0x3d8] sm:$0xff]
    %v250 = vld [vmem:[#allocation5 + $0x3e0] sm:$0xff]
    %v251 = vld [vmem:[#allocation5 + $0x3e8] sm:$0xff]
    %v252 = vld [vmem:[#allocation5 + $0x3f0] sm:$0xff]
    %v253 = vld [vmem:[#allocation5 + $0x3f8] sm:$0xff]
    %v254 = vld [vmem:[#allocation5 + $0x400] sm:$0xff]
    %v255 = vld [vmem:[#allocation5 + $0x408] sm:$0xff]
    %v256 = vld [vmem:[#allocation5 + $0x410] sm:$0xff]
    %v257 = vld [vmem:[#allocation5 + $0x418] sm:$0xff]
    %v258 = vld [vmem:[#allocation5 + $0x420] sm:$0xff]
    %v259 = vld [vmem:[#allocation5 + $0x428] sm:$0xff]
    %v260 = vld [vmem:[#allocation5 + $0x430] sm:$0xff]
    %v261 = vld [vmem:[#allocation5 + $0x438] sm:$0xff]
    %v262 = vld [vmem:[#allocation5 + $0x440] sm:$0xff]
    %v263 = vld [vmem:[#allocation5 + $0x448] sm:$0xff]
    %v264 = vld [vmem:[#allocation5 + $0x450] sm:$0xff]
    %v265 = vld [vmem:[#allocation5 + $0x458] sm:$0xff]
    %v266 = vld [vmem:[#allocation5 + $0x460] sm:$0xff]
    %v267 = vld [vmem:[#allocation5 + $0x468] sm:$0xff]
    %v268 = vld [vmem:[#allocation5 + $0x470] sm:$0xff]
    %v269 = vld [vmem:[#allocation5 + $0x478] sm:$0xff]
    %v270 = vld [vmem:[#allocation5 + $0x480] sm:$0xff]
    %v271 = vld [vmem:[#allocation5 + $0x488] sm:$0xff]
    %v272 = vld [vmem:[#allocation5 + $0x490] sm:$0xff]
    %v273 = vld [vmem:[#allocation5 + $0x498] sm:$0xff]
    %v274 = vld [vmem:[#allocation5 + $0x4a0] sm:$0xff]
    %v275 = vld [vmem:[#allocation5 + $0x4a8] sm:$0xff]
    %v276 = vld [vmem:[#allocation5 + $0x4b0] sm:$0xff]
    %v277 = vld [vmem:[#allocation5 + $0x4b8] sm:$0xff]
    %v278 = vld [vmem:[#allocation5 + $0x4c0] sm:$0xff]
    %v279 = vld [vmem:[#allocation5 + $0x4c8] sm:$0xff]
    %v280 = vld [vmem:[#allocation5 + $0x4d0] sm:$0xff]
    %v281 = vld [vmem:[#allocation5 + $0x4d8] sm:$0xff]
    %v282 = vld [vmem:[#allocation5 + $0x4e0] sm:$0xff]
    %v283 = vld [vmem:[#allocation5 + $0x4e8] sm:$0xff]
    %v284 = vld [vmem:[#allocation5 + $0x4f0] sm:$0xff]
    %v285 = vld [vmem:[#allocation5 + $0x4f8] sm:$0xff]
    %v286 = vld [vmem:[#allocation5 + $0x500] sm:$0xff]
    %v287 = vld [vmem:[#allocation5 + $0x508] sm:$0xff]
    %v288 = vld [vmem:[#allocation5 + $0x510] sm:$0xff]
    %v289 = vld [vmem:[#allocation5 + $0x518] sm:$0xff]
    %v290 = vld [vmem:[#allocation5 + $0x520] sm:$0xff]
    %v291 = vld [vmem:[#allocation5 + $0x528] sm:$0xff]
    %v292 = vld [vmem:[#allocation5 + $0x530] sm:$0xff]
    %v293 = vld [vmem:[#allocation5 + $0x538] sm:$0xff]
    %v294 = vld [vmem:[#allocation5 + $0x540] sm:$0xff]
    %v295 = vld [vmem:[#allocation5 + $0x548] sm:$0xff]
    %v296 = vld [vmem:[#allocation5 + $0x550] sm:$0xff]
    %v297 = vld [vmem:[#allocation5 + $0x558] sm:$0xff]
    %v298 = vld [vmem:[#allocation5 + $0x560] sm:$0xff]
    %v299 = vld [vmem:[#allocation5 + $0x568] sm:$0xff]
    %v300 = vld [vmem:[#allocation5 + $0x570] sm:$0xff]
    %v301 = vld [vmem:[#allocation5 + $0x578] sm:$0xff]
    %v302 = vld [vmem:[#allocation5 + $0x580] sm:$0xff]
    %v303 = vld [vmem:[#allocation5 + $0x588] sm:$0xff]
    %v304 = vld [vmem:[#allocation5 + $0x590] sm:$0xff]
    %v305 = vld [vmem:[#allocation5 + $0x598] sm:$0xff]
    %v306 = vld [vmem:[#allocation5 + $0x5a0] sm:$0xff]
    %v307 = vld [vmem:[#allocation5 + $0x5a8] sm:$0xff]
    %v308 = vld [vmem:[#allocation5 + $0x5b0] sm:$0xff]
    %v309 = vld [vmem:[#allocation5 + $0x5b8] sm:$0xff]
    %v310 = vld [vmem:[#allocation5 + $0x5c0] sm:$0xff]
    %v311 = vld [vmem:[#allocation5 + $0x5c8] sm:$0xff]
    %v312 = vld [vmem:[#allocation5 + $0x5d0] sm:$0xff]
    %v313 = vld [vmem:[#allocation5 + $0x5d8] sm:$0xff]
    %v314 = vld [vmem:[#allocation5 + $0x5e0] sm:$0xff]
    %v315 = vld [vmem:[#allocation5 + $0x5e8] sm:$0xff]
    %v316 = vld [vmem:[#allocation5 + $0x5f0] sm:$0xff]
    %v317 = vld [vmem:[#allocation5 + $0x5f8] sm:$0xff]
    %v318 = vld [vmem:[#allocation5 + $0x600] sm:$0xff]
    %v319 = vld [vmem:[#allocation5 + $0x608] sm:$0xff]
    %v320 = vld [vmem:[#allocation5 + $0x610] sm:$0xff]
    %v321 = vld [vmem:[#allocation5 + $0x618] sm:$0xff]
    %v322 = vld [vmem:[#allocation7] sm:$0xf]
    %v324 = vlaneseq
    %v325 = vshrl.u32 %v324, 7
    %v326 = vsub.s32 0, %v325
    %v327 = vrot.slane %v322, %v326
    %v328 = vlaneseq
    %v329 = vshrl.u32 %v328, 7
    %v330 = vsub.s32 1, %v329
    %v331 = vrot.slane %v322, %v330
    %v332 = vlaneseq
    %v333 = vshrl.u32 %v332, 7
    %v334 = vsub.s32 2, %v333
    %v335 = vrot.slane %v322, %v334
    %v336 = vlaneseq
    %v337 = vshrl.u32 %v336, 7
    %v338 = vsub.s32 3, %v337
    %v339 = vrot.slane %v322, %v338
    %v540 = vunpack.c.l.b16 %v126
    %v541 = vunpack.c.h.b16 %v126
    %v542 = vunpack.c.l.b16 %v127
    %v543 = vunpack.c.h.b16 %v127
    %v544 = vunpack.c.l.b16 %v128
    %v545 = vunpack.c.h.b16 %v128
    %v546 = vunpack.c.l.b16 %v129
    %v547 = vunpack.c.h.b16 %v129
    %v548 = vunpack.c.l.b16 %v130
    %v549 = vunpack.c.h.b16 %v130
    %v550 = vunpack.c.l.b16 %v131
    %v551 = vunpack.c.h.b16 %v131
    %v552 = vunpack.c.l.b16 %v132
    %v553 = vunpack.c.h.b16 %v132
    %v554 = vunpack.c.l.b16 %v133
    %v555 = vunpack.c.h.b16 %v133
    %v556 = vunpack.c.l.b16 %v134
    %v557 = vunpack.c.h.b16 %v134
    %v558 = vunpack.c.l.b16 %v135
    %v559 = vunpack.c.h.b16 %v135
    %v560 = vunpack.c.l.b16 %v136
    %v561 = vunpack.c.h.b16 %v136
    %v562 = vunpack.c.l.b16 %v137
    %v563 = vunpack.c.h.b16 %v137
    %v564 = vunpack.c.l.b16 %v138
    %v565 = vunpack.c.h.b16 %v138
    %v566 = vunpack.c.l.b16 %v139
    %v567 = vunpack.c.h.b16 %v139
    %v568 = vunpack.c.l.b16 %v140
    %v569 = vunpack.c.h.b16 %v140
    %v570 = vunpack.c.l.b16 %v141
    %v571 = vunpack.c.h.b16 %v141
    %v572 = vunpack.c.l.b16 %v142
    %v573 = vunpack.c.h.b16 %v142
    %v574 = vunpack.c.l.b16 %v143
    %v575 = vunpack.c.h.b16 %v143
    %v576 = vunpack.c.l.b16 %v144
    %v577 = vunpack.c.h.b16 %v144
    %v578 = vunpack.c.l.b16 %v145
    %v579 = vunpack.c.h.b16 %v145
    %v580 = vunpack.c.l.b16 %v146
    %v581 = vunpack.c.h.b16 %v146
    %v582 = vunpack.c.l.b16 %v147
    %v583 = vunpack.c.h.b16 %v147
    %v584 = vunpack.c.l.b16 %v148
    %v585 = vunpack.c.h.b16 %v148
    %v586 = vunpack.c.l.b16 %v149
    %v587 = vunpack.c.h.b16 %v149
    %v588 = vunpack.c.l.b16 %v150
    %v589 = vunpack.c.h.b16 %v150
    %v590 = vunpack.c.l.b16 %v151
    %v591 = vunpack.c.h.b16 %v151
    %v592 = vunpack.c.l.b16 %v152
    %v593 = vunpack.c.h.b16 %v152
    %v594 = vunpack.c.l.b16 %v153
    %v595 = vunpack.c.h.b16 %v153
    %v596 = vunpack.c.l.b16 %v154
    %v597 = vunpack.c.h.b16 %v154
    %v598 = vunpack.c.l.b16 %v155
    %v599 = vunpack.c.h.b16 %v155
    %v600 = vunpack.c.l.b16 %v156
    %v601 = vunpack.c.h.b16 %v156
    %v602 = vunpack.c.l.b16 %v157
    %v603 = vunpack.c.h.b16 %v157
    %v604 = vunpack.c.l.b16 %v158
    %v605 = vunpack.c.h.b16 %v158
    %v606 = vunpack.c.l.b16 %v159
    %v607 = vunpack.c.h.b16 %v159
    %v608 = vunpack.c.l.b16 %v160
    %v609 = vunpack.c.h.b16 %v160
    %v610 = vunpack.c.l.b16 %v161
    %v611 = vunpack.c.h.b16 %v161
    %v612 = vunpack.c.l.b16 %v162
    %v613 = vunpack.c.h.b16 %v162
    %v614 = vunpack.c.l.b16 %v163
    %v615 = vunpack.c.h.b16 %v163
    %v616 = vunpack.c.l.b16 %v164
    %v617 = vunpack.c.h.b16 %v164
    %v618 = vunpack.c.l.b16 %v165
    %v619 = vunpack.c.h.b16 %v165
    %v620 = vunpack.c.l.b16 %v166
    %v621 = vunpack.c.h.b16 %v166
    %v622 = vunpack.c.l.b16 %v167
    %v623 = vunpack.c.h.b16 %v167
    %v624 = vunpack.c.l.b16 %v168
    %v625 = vunpack.c.h.b16 %v168
    %v626 = vunpack.c.l.b16 %v169
    %v627 = vunpack.c.h.b16 %v169
    %v628 = vunpack.c.l.b16 %v170
    %v629 = vunpack.c.h.b16 %v170
    %v630 = vunpack.c.l.b16 %v171
    %v631 = vunpack.c.h.b16 %v171
    %v632 = vunpack.c.l.b16 %v172
    %v633 = vunpack.c.h.b16 %v172
    %v634 = vunpack.c.l.b16 %v173
    %v635 = vunpack.c.h.b16 %v173
    %v636 = vunpack.c.l.b16 %v174
    %v637 = vunpack.c.h.b16 %v174
    %v638 = vunpack.c.l.b16 %v175
    %v639 = vunpack.c.h.b16 %v175
    %v640 = vunpack.c.l.b16 %v176
    %v641 = vunpack.c.h.b16 %v176
    %v642 = vunpack.c.l.b16 %v177
    %v643 = vunpack.c.h.b16 %v177
    %v644 = vunpack.c.l.b16 %v178
    %v645 = vunpack.c.h.b16 %v178
    %v646 = vunpack.c.l.b16 %v179
    %v647 = vunpack.c.h.b16 %v179
    %v648 = vunpack.c.l.b16 %v180
    %v649 = vunpack.c.h.b16 %v180
    %v650 = vunpack.c.l.b16 %v181
    %v651 = vunpack.c.h.b16 %v181
    %v652 = vunpack.c.l.b16 %v182
    %v653 = vunpack.c.h.b16 %v182
    %v654 = vunpack.c.l.b16 %v183
    %v655 = vunpack.c.h.b16 %v183
    %v656 = vunpack.c.l.b16 %v184
    %v657 = vunpack.c.h.b16 %v184
    %v658 = vunpack.c.l.b16 %v185
    %v659 = vunpack.c.h.b16 %v185
    %v660 = vunpack.c.l.b16 %v186
    %v661 = vunpack.c.h.b16 %v186
    %v662 = vunpack.c.l.b16 %v187
    %v663 = vunpack.c.h.b16 %v187
    %v664 = vunpack.c.l.b16 %v188
    %v665 = vunpack.c.h.b16 %v188
    %v666 = vunpack.c.l.b16 %v189
    %v667 = vunpack.c.h.b16 %v189
    %v668 = vunpack.c.l.b16 %v190
    %v669 = vunpack.c.h.b16 %v190
    %v670 = vunpack.c.l.b16 %v191
    %v671 = vunpack.c.h.b16 %v191
    %v672 = vunpack.c.l.b16 %v192
    %v673 = vunpack.c.h.b16 %v192
    %v674 = vunpack.c.l.b16 %v193
    %v675 = vunpack.c.h.b16 %v193
    %v676 = vunpack.c.l.b16 %v194
    %v677 = vunpack.c.h.b16 %v194
    %v678 = vunpack.c.l.b16 %v195
    %v679 = vunpack.c.h.b16 %v195
    %v680 = vunpack.c.l.b16 %v196
    %v681 = vunpack.c.h.b16 %v196
    %v682 = vunpack.c.l.b16 %v197
    %v683 = vunpack.c.h.b16 %v197
    %v684 = vunpack.c.l.b16 %v198
    %v685 = vunpack.c.h.b16 %v198
    %v686 = vunpack.c.l.b16 %v199
    %v687 = vunpack.c.h.b16 %v199
    %v688 = vunpack.c.l.b16 %v200
    %v689 = vunpack.c.h.b16 %v200
    %v690 = vunpack.c.l.b16 %v201
    %v691 = vunpack.c.h.b16 %v201
    %v692 = vunpack.c.l.b16 %v202
    %v693 = vunpack.c.h.b16 %v202
    %v694 = vunpack.c.l.b16 %v203
    %v695 = vunpack.c.h.b16 %v203
    %v696 = vunpack.c.l.b16 %v204
    %v697 = vunpack.c.h.b16 %v204
    %v698 = vunpack.c.l.b16 %v205
    %v699 = vunpack.c.h.b16 %v205
    %v700 = vunpack.c.l.b16 %v206
    %v701 = vunpack.c.h.b16 %v206
    %v702 = vunpack.c.l.b16 %v207
    %v703 = vunpack.c.h.b16 %v207
    %v704 = vunpack.c.l.b16 %v208
    %v705 = vunpack.c.h.b16 %v208
    %v706 = vunpack.c.l.b16 %v209
    %v707 = vunpack.c.h.b16 %v209
    %v708 = vunpack.c.l.b16 %v210
    %v709 = vunpack.c.h.b16 %v210
    %v710 = vunpack.c.l.b16 %v211
    %v711 = vunpack.c.h.b16 %v211
    %v712 = vunpack.c.l.b16 %v212
    %v713 = vunpack.c.h.b16 %v212
    %v714 = vunpack.c.l.b16 %v213
    %v715 = vunpack.c.h.b16 %v213
    %v716 = vunpack.c.l.b16 %v214
    %v717 = vunpack.c.h.b16 %v214
    %v718 = vunpack.c.l.b16 %v215
    %v719 = vunpack.c.h.b16 %v215
    %v720 = vunpack.c.l.b16 %v216
    %v721 = vunpack.c.h.b16 %v216
    %v722 = vunpack.c.l.b16 %v217
    %v723 = vunpack.c.h.b16 %v217
    %v724 = vunpack.c.l.b16 %v218
    %v725 = vunpack.c.h.b16 %v218
    %v726 = vunpack.c.l.b16 %v219
    %v727 = vunpack.c.h.b16 %v219
    %v728 = vunpack.c.l.b16 %v220
    %v729 = vunpack.c.h.b16 %v220
    %v730 = vunpack.c.l.b16 %v221
    %v731 = vunpack.c.h.b16 %v221
    %v732 = vunpack.c.l.b16 %v222
    %v733 = vunpack.c.h.b16 %v222
    %v734 = vunpack.c.l.b16 %v223
    %v735 = vunpack.c.h.b16 %v223
    %v736 = vunpack.c.l.b16 %v224
    %v737 = vunpack.c.h.b16 %v224
    %v738 = vunpack.c.l.b16 %v225
    %v739 = vunpack.c.h.b16 %v225
    %v740 = vunpack.c.l.b16 %v226
    %v741 = vunpack.c.h.b16 %v226
    %v742 = vunpack.c.l.b16 %v227
    %v743 = vunpack.c.h.b16 %v227
    %v744 = vunpack.c.l.b16 %v228
    %v745 = vunpack.c.h.b16 %v228
    %v746 = vunpack.c.l.b16 %v229
    %v747 = vunpack.c.h.b16 %v229
    %v748 = vunpack.c.l.b16 %v230
    %v749 = vunpack.c.h.b16 %v230
    %v750 = vunpack.c.l.b16 %v231
    %v751 = vunpack.c.h.b16 %v231
    %v752 = vunpack.c.l.b16 %v232
    %v753 = vunpack.c.h.b16 %v232
    %v754 = vunpack.c.l.b16 %v233
    %v755 = vunpack.c.h.b16 %v233
    %v756 = vunpack.c.l.b16 %v234
    %v757 = vunpack.c.h.b16 %v234
    %v758 = vunpack.c.l.b16 %v235
    %v759 = vunpack.c.h.b16 %v235
    %v760 = vunpack.c.l.b16 %v236
    %v761 = vunpack.c.h.b16 %v236
    %v762 = vunpack.c.l.b16 %v237
    %v763 = vunpack.c.h.b16 %v237
    %v764 = vunpack.c.l.b16 %v238
    %v765 = vunpack.c.h.b16 %v238
    %v766 = vunpack.c.l.b16 %v239
    %v767 = vunpack.c.h.b16 %v239
    %v768 = vunpack.c.l.b16 %v240
    %v769 = vunpack.c.h.b16 %v240
    %v770 = vunpack.c.l.b16 %v241
    %v771 = vunpack.c.h.b16 %v241
    %v772 = vunpack.c.l.b16 %v242
    %v773 = vunpack.c.h.b16 %v242
    %v774 = vunpack.c.l.b16 %v243
    %v775 = vunpack.c.h.b16 %v243
    %v776 = vunpack.c.l.b16 %v244
    %v777 = vunpack.c.h.b16 %v244
    %v778 = vunpack.c.l.b16 %v245
    %v779 = vunpack.c.h.b16 %v245
    %v780 = vunpack.c.l.b16 %v246
    %v781 = vunpack.c.h.b16 %v246
    %v782 = vunpack.c.l.b16 %v247
    %v783 = vunpack.c.h.b16 %v247
    %v784 = vunpack.c.l.b16 %v248
    %v785 = vunpack.c.h.b16 %v248
    %v786 = vunpack.c.l.b16 %v249
    %v787 = vunpack.c.h.b16 %v249
    %v788 = vunpack.c.l.b16 %v250
    %v789 = vunpack.c.h.b16 %v250
    %v790 = vunpack.c.l.b16 %v251
    %v791 = vunpack.c.h.b16 %v251
    %v792 = vunpack.c.l.b16 %v252
    %v793 = vunpack.c.h.b16 %v252
    %v794 = vunpack.c.l.b16 %v253
    %v795 = vunpack.c.h.b16 %v253
    %v796 = vunpack.c.l.b16 %v254
    %v797 = vunpack.c.h.b16 %v254
    %v798 = vunpack.c.l.b16 %v255
    %v799 = vunpack.c.h.b16 %v255
    %v800 = vunpack.c.l.b16 %v256
    %v801 = vunpack.c.h.b16 %v256
    %v802 = vunpack.c.l.b16 %v257
    %v803 = vunpack.c.h.b16 %v257
    %v804 = vunpack.c.l.b16 %v258
    %v805 = vunpack.c.h.b16 %v258
    %v806 = vunpack.c.l.b16 %v259
    %v807 = vunpack.c.h.b16 %v259
    %v808 = vunpack.c.l.b16 %v260
    %v809 = vunpack.c.h.b16 %v260
    %v810 = vunpack.c.l.b16 %v261
    %v811 = vunpack.c.h.b16 %v261
    %v812 = vunpack.c.l.b16 %v262
    %v813 = vunpack.c.h.b16 %v262
    %v814 = vunpack.c.l.b16 %v263
    %v815 = vunpack.c.h.b16 %v263
    %v816 = vunpack.c.l.b16 %v264
    %v817 = vunpack.c.h.b16 %v264
    %v818 = vunpack.c.l.b16 %v265
    %v819 = vunpack.c.h.b16 %v265
    %v820 = vunpack.c.l.b16 %v266
    %v821 = vunpack.c.h.b16 %v266
    %v822 = vunpack.c.l.b16 %v267
    %v823 = vunpack.c.h.b16 %v267
    %v824 = vunpack.c.l.b16 %v268
    %v825 = vunpack.c.h.b16 %v268
    %v826 = vunpack.c.l.b16 %v269
    %v827 = vunpack.c.h.b16 %v269
    %v828 = vunpack.c.l.b16 %v270
    %v829 = vunpack.c.h.b16 %v270
    %v830 = vunpack.c.l.b16 %v271
    %v831 = vunpack.c.h.b16 %v271
    %v832 = vunpack.c.l.b16 %v272
    %v833 = vunpack.c.h.b16 %v272
    %v834 = vunpack.c.l.b16 %v273
    %v835 = vunpack.c.h.b16 %v273
    %v836 = vunpack.c.l.b16 %v274
    %v837 = vunpack.c.h.b16 %v274
    %v838 = vunpack.c.l.b16 %v275
    %v839 = vunpack.c.h.b16 %v275
    %v840 = vunpack.c.l.b16 %v276
    %v841 = vunpack.c.h.b16 %v276
    %v842 = vunpack.c.l.b16 %v277
    %v843 = vunpack.c.h.b16 %v277
    %v844 = vunpack.c.l.b16 %v278
    %v845 = vunpack.c.h.b16 %v278
    %v846 = vunpack.c.l.b16 %v279
    %v847 = vunpack.c.h.b16 %v279
    %v848 = vunpack.c.l.b16 %v280
    %v849 = vunpack.c.h.b16 %v280
    %v850 = vunpack.c.l.b16 %v281
    %v851 = vunpack.c.h.b16 %v281
    %v852 = vunpack.c.l.b16 %v282
    %v853 = vunpack.c.h.b16 %v282
    %v854 = vunpack.c.l.b16 %v283
    %v855 = vunpack.c.h.b16 %v283
    %v856 = vunpack.c.l.b16 %v284
    %v857 = vunpack.c.h.b16 %v284
    %v858 = vunpack.c.l.b16 %v285
    %v859 = vunpack.c.h.b16 %v285
    %v860 = vunpack.c.l.b16 %v286
    %v861 = vunpack.c.h.b16 %v286
    %v862 = vunpack.c.l.b16 %v287
    %v863 = vunpack.c.h.b16 %v287
    %v864 = vunpack.c.l.b16 %v288
    %v865 = vunpack.c.h.b16 %v288
    %v866 = vunpack.c.l.b16 %v289
    %v867 = vunpack.c.h.b16 %v289
    %v868 = vunpack.c.l.b16 %v290
    %v869 = vunpack.c.h.b16 %v290
    %v870 = vunpack.c.l.b16 %v291
    %v871 = vunpack.c.h.b16 %v291
    %v872 = vunpack.c.l.b16 %v292
    %v873 = vunpack.c.h.b16 %v292
    %v874 = vunpack.c.l.b16 %v293
    %v875 = vunpack.c.h.b16 %v293
    %v876 = vunpack.c.l.b16 %v294
    %v877 = vunpack.c.h.b16 %v294
    %v878 = vunpack.c.l.b16 %v295
    %v879 = vunpack.c.h.b16 %v295
    %v880 = vunpack.c.l.b16 %v296
    %v881 = vunpack.c.h.b16 %v296
    %v882 = vunpack.c.l.b16 %v297
    %v883 = vunpack.c.h.b16 %v297
    %v884 = vunpack.c.l.b16 %v298
    %v885 = vunpack.c.h.b16 %v298
    %v886 = vunpack.c.l.b16 %v299
    %v887 = vunpack.c.h.b16 %v299
    %v888 = vunpack.c.l.b16 %v300
    %v889 = vunpack.c.h.b16 %v300
    %v890 = vunpack.c.l.b16 %v301
    %v891 = vunpack.c.h.b16 %v301
    %v892 = vunpack.c.l.b16 %v302
    %v893 = vunpack.c.h.b16 %v302
    %v894 = vunpack.c.l.b16 %v303
    %v895 = vunpack.c.h.b16 %v303
    %v896 = vunpack.c.l.b16 %v304
    %v897 = vunpack.c.h.b16 %v304
    %v898 = vunpack.c.l.b16 %v305
    %v899 = vunpack.c.h.b16 %v305
    %v900 = vunpack.c.l.b16 %v306
    %v901 = vunpack.c.h.b16 %v306
    %v902 = vunpack.c.l.b16 %v307
    %v903 = vunpack.c.h.b16 %v307
    %v904 = vunpack.c.l.b16 %v308
    %v905 = vunpack.c.h.b16 %v308
    %v906 = vunpack.c.l.b16 %v309
    %v907 = vunpack.c.h.b16 %v309
    %v908 = vunpack.c.l.b16 %v310
    %v909 = vunpack.c.h.b16 %v310
    %v910 = vunpack.c.l.b16 %v311
    %v911 = vunpack.c.h.b16 %v311
    %v912 = vunpack.c.l.b16 %v312
    %v913 = vunpack.c.h.b16 %v312
    %v914 = vunpack.c.l.b16 %v313
    %v915 = vunpack.c.h.b16 %v313
    %v916 = vunpack.c.l.b16 %v314
    %v917 = vunpack.c.h.b16 %v314
    %v918 = vunpack.c.l.b16 %v315
    %v919 = vunpack.c.h.b16 %v315
    %v920 = vunpack.c.l.b16 %v316
    %v921 = vunpack.c.h.b16 %v316
    %v922 = vunpack.c.l.b16 %v317
    %v923 = vunpack.c.h.b16 %v317
    %v924 = vunpack.c.l.b16 %v318
    %v925 = vunpack.c.h.b16 %v318
    %v926 = vunpack.c.l.b16 %v319
    %v927 = vunpack.c.h.b16 %v319
    %v928 = vunpack.c.l.b16 %v320
    %v929 = vunpack.c.h.b16 %v320
    %v930 = vunpack.c.l.b16 %v321
    %v931 = vunpack.c.h.b16 %v321
    %v932 = vpack.c.b16 %v544, %v540
    %v933 = vpack.c.b16 %v545, %v541
    %v934 = vpack.c.b16 %v546, %v542
    %v935 = vpack.c.b16 %v547, %v543
    %v936 = vpack.c.b16 %v552, %v548
    %v937 = vpack.c.b16 %v553, %v549
    %v938 = vpack.c.b16 %v554, %v550
    %v939 = vpack.c.b16 %v555, %v551
    %v940 = vpack.c.b16 %v560, %v556
    %v941 = vpack.c.b16 %v561, %v557
    %v942 = vpack.c.b16 %v562, %v558
    %v943 = vpack.c.b16 %v563, %v559
    %v944 = vpack.c.b16 %v568, %v564
    %v945 = vpack.c.b16 %v569, %v565
    %v946 = vpack.c.b16 %v570, %v566
    %v947 = vpack.c.b16 %v571, %v567
    %v948 = vpack.c.b16 %v576, %v572
    %v949 = vpack.c.b16 %v577, %v573
    %v950 = vpack.c.b16 %v578, %v574
    %v951 = vpack.c.b16 %v579, %v575
    %v952 = vpack.c.b16 %v584, %v580
    %v953 = vpack.c.b16 %v585, %v581
    %v954 = vpack.c.b16 %v586, %v582
    %v955 = vpack.c.b16 %v587, %v583
    %v956 = vpack.c.b16 %v592, %v588
    %v957 = vpack.c.b16 %v593, %v589
    %v958 = vpack.c.b16 %v594, %v590
    %v959 = vpack.c.b16 %v595, %v591
    %v960 = vpack.c.b16 %v600, %v596
    %v961 = vpack.c.b16 %v601, %v597
    %v962 = vpack.c.b16 %v602, %v598
    %v963 = vpack.c.b16 %v603, %v599
    %v964 = vpack.c.b16 %v608, %v604
    %v965 = vpack.c.b16 %v609, %v605
    %v966 = vpack.c.b16 %v610, %v606
    %v967 = vpack.c.b16 %v611, %v607
    %v968 = vpack.c.b16 %v616, %v612
    %v969 = vpack.c.b16 %v617, %v613
    %v970 = vpack.c.b16 %v618, %v614
    %v971 = vpack.c.b16 %v619, %v615
    %v972 = vpack.c.b16 %v624, %v620
    %v973 = vpack.c.b16 %v625, %v621
    %v974 = vpack.c.b16 %v626, %v622
    %v975 = vpack.c.b16 %v627, %v623
    %v976 = vpack.c.b16 %v632, %v628
    %v977 = vpack.c.b16 %v633, %v629
    %v978 = vpack.c.b16 %v634, %v630
    %v979 = vpack.c.b16 %v635, %v631
    %v980 = vpack.c.b16 %v640, %v636
    %v981 = vpack.c.b16 %v641, %v637
    %v982 = vpack.c.b16 %v642, %v638
    %v983 = vpack.c.b16 %v643, %v639
    %v984 = vpack.c.b16 %v648, %v644
    %v985 = vpack.c.b16 %v649, %v645
    %v986 = vpack.c.b16 %v650, %v646
    %v987 = vpack.c.b16 %v651, %v647
    %v988 = vpack.c.b16 %v656, %v652
    %v989 = vpack.c.b16 %v657, %v653
    %v990 = vpack.c.b16 %v658, %v654
    %v991 = vpack.c.b16 %v659, %v655
    %v992 = vpack.c.b16 %v664, %v660
    %v993 = vpack.c.b16 %v665, %v661
    %v994 = vpack.c.b16 %v666, %v662
    %v995 = vpack.c.b16 %v667, %v663
    %v996 = vpack.c.b16 %v672, %v668
    %v997 = vpack.c.b16 %v673, %v669
    %v998 = vpack.c.b16 %v674, %v670
    %v999 = vpack.c.b16 %v675, %v671
    %v1000 = vpack.c.b16 %v680, %v676
    %v1001 = vpack.c.b16 %v681, %v677
    %v1002 = vpack.c.b16 %v682, %v678
    %v1003 = vpack.c.b16 %v683, %v679
    %v1004 = vpack.c.b16 %v688, %v684
    %v1005 = vpack.c.b16 %v689, %v685
    %v1006 = vpack.c.b16 %v690, %v686
    %v1007 = vpack.c.b16 %v691, %v687
    %v1008 = vpack.c.b16 %v696, %v692
    %v1009 = vpack.c.b16 %v697, %v693
    %v1010 = vpack.c.b16 %v698, %v694
    %v1011 = vpack.c.b16 %v699, %v695
    %v1012 = vpack.c.b16 %v704, %v700
    %v1013 = vpack.c.b16 %v705, %v701
    %v1014 = vpack.c.b16 %v706, %v702
    %v1015 = vpack.c.b16 %v707, %v703
    %v1016 = vpack.c.b16 %v712, %v708
    %v1017 = vpack.c.b16 %v713, %v709
    %v1018 = vpack.c.b16 %v714, %v710
    %v1019 = vpack.c.b16 %v715, %v711
    %v1020 = vpack.c.b16 %v720, %v716
    %v1021 = vpack.c.b16 %v721, %v717
    %v1022 = vpack.c.b16 %v722, %v718
    %v1023 = vpack.c.b16 %v723, %v719
    %v1024 = vpack.c.b16 %v728, %v724
    %v1025 = vpack.c.b16 %v729, %v725
    %v1026 = vpack.c.b16 %v730, %v726
    %v1027 = vpack.c.b16 %v731, %v727
    %v1028 = vpack.c.b16 %v736, %v732
    %v1029 = vpack.c.b16 %v737, %v733
    %v1030 = vpack.c.b16 %v738, %v734
    %v1031 = vpack.c.b16 %v739, %v735
    %v1032 = vpack.c.b16 %v744, %v740
    %v1033 = vpack.c.b16 %v745, %v741
    %v1034 = vpack.c.b16 %v746, %v742
    %v1035 = vpack.c.b16 %v747, %v743
    %v1036 = vpack.c.b16 %v752, %v748
    %v1037 = vpack.c.b16 %v753, %v749
    %v1038 = vpack.c.b16 %v754, %v750
    %v1039 = vpack.c.b16 %v755, %v751
    %v1040 = vpack.c.b16 %v760, %v756
    %v1041 = vpack.c.b16 %v761, %v757
    %v1042 = vpack.c.b16 %v762, %v758
    %v1043 = vpack.c.b16 %v763, %v759
    %v1044 = vpack.c.b16 %v768, %v764
    %v1045 = vpack.c.b16 %v769, %v765
    %v1046 = vpack.c.b16 %v770, %v766
    %v1047 = vpack.c.b16 %v771, %v767
    %v1048 = vpack.c.b16 %v776, %v772
    %v1049 = vpack.c.b16 %v777, %v773
    %v1050 = vpack.c.b16 %v778, %v774
    %v1051 = vpack.c.b16 %v779, %v775
    %v1052 = vpack.c.b16 %v784, %v780
    %v1053 = vpack.c.b16 %v785, %v781
    %v1054 = vpack.c.b16 %v786, %v782
    %v1055 = vpack.c.b16 %v787, %v783
    %v1056 = vpack.c.b16 %v792, %v788
    %v1057 = vpack.c.b16 %v793, %v789
    %v1058 = vpack.c.b16 %v794, %v790
    %v1059 = vpack.c.b16 %v795, %v791
    %v1060 = vpack.c.b16 %v800, %v796
    %v1061 = vpack.c.b16 %v801, %v797
    %v1062 = vpack.c.b16 %v802, %v798
    %v1063 = vpack.c.b16 %v803, %v799
    %v1064 = vpack.c.b16 %v808, %v804
    %v1065 = vpack.c.b16 %v809, %v805
    %v1066 = vpack.c.b16 %v810, %v806
    %v1067 = vpack.c.b16 %v811, %v807
    %v1068 = vpack.c.b16 %v816, %v812
    %v1069 = vpack.c.b16 %v817, %v813
    %v1070 = vpack.c.b16 %v818, %v814
    %v1071 = vpack.c.b16 %v819, %v815
    %v1072 = vpack.c.b16 %v824, %v820
    %v1073 = vpack.c.b16 %v825, %v821
    %v1074 = vpack.c.b16 %v826, %v822
    %v1075 = vpack.c.b16 %v827, %v823
    %v1076 = vpack.c.b16 %v832, %v828
    %v1077 = vpack.c.b16 %v833, %v829
    %v1078 = vpack.c.b16 %v834, %v830
    %v1079 = vpack.c.b16 %v835, %v831
    %v1080 = vpack.c.b16 %v840, %v836
    %v1081 = vpack.c.b16 %v841, %v837
    %v1082 = vpack.c.b16 %v842, %v838
    %v1083 = vpack.c.b16 %v843, %v839
    %v1084 = vpack.c.b16 %v848, %v844
    %v1085 = vpack.c.b16 %v849, %v845
    %v1086 = vpack.c.b16 %v850, %v846
    %v1087 = vpack.c.b16 %v851, %v847
    %v1088 = vpack.c.b16 %v856, %v852
    %v1089 = vpack.c.b16 %v857, %v853
    %v1090 = vpack.c.b16 %v858, %v854
    %v1091 = vpack.c.b16 %v859, %v855
    %v1092 = vpack.c.b16 %v864, %v860
    %v1093 = vpack.c.b16 %v865, %v861
    %v1094 = vpack.c.b16 %v866, %v862
    %v1095 = vpack.c.b16 %v867, %v863
    %v1096 = vpack.c.b16 %v872, %v868
    %v1097 = vpack.c.b16 %v873, %v869
    %v1098 = vpack.c.b16 %v874, %v870
    %v1099 = vpack.c.b16 %v875, %v871
    %v1100 = vpack.c.b16 %v880, %v876
    %v1101 = vpack.c.b16 %v881, %v877
    %v1102 = vpack.c.b16 %v882, %v878
    %v1103 = vpack.c.b16 %v883, %v879
    %v1104 = vpack.c.b16 %v888, %v884
    %v1105 = vpack.c.b16 %v889, %v885
    %v1106 = vpack.c.b16 %v890, %v886
    %v1107 = vpack.c.b16 %v891, %v887
    %v1108 = vpack.c.b16 %v896, %v892
    %v1109 = vpack.c.b16 %v897, %v893
    %v1110 = vpack.c.b16 %v898, %v894
    %v1111 = vpack.c.b16 %v899, %v895
    %v1112 = vpack.c.b16 %v904, %v900
    %v1113 = vpack.c.b16 %v905, %v901
    %v1114 = vpack.c.b16 %v906, %v902
    %v1115 = vpack.c.b16 %v907, %v903
    %v1116 = vpack.c.b16 %v912, %v908
    %v1117 = vpack.c.b16 %v913, %v909
    %v1118 = vpack.c.b16 %v914, %v910
    %v1119 = vpack.c.b16 %v915, %v911
    %v1120 = vpack.c.b16 %v920, %v916
    %v1121 = vpack.c.b16 %v921, %v917
    %v1122 = vpack.c.b16 %v922, %v918
    %v1123 = vpack.c.b16 %v923, %v919
    %v1124 = vpack.c.b16 %v928, %v924
    %v1125 = vpack.c.b16 %v929, %v925
    %v1126 = vpack.c.b16 %v930, %v926
    %v1127 = vpack.c.b16 %v931, %v927
    %vm1324 = vcmask 130048
    %v1326 = vsel %vm1324, %v125, 0
    %1328 = vmatprep.subr.bf16.mxu0 %v961
    %1329 = vmatpush1.bf16.msra.mxu0 %v960
    %1330 = vmatprep.subr.bf16.mxu0 %v957
    %1331 = vmatpush1.bf16.msra.mxu0 %v956
    %1332 = vmatprep.subr.bf16.mxu0 %v953
    %1333 = vmatpush1.bf16.msra.mxu0 %v952
    %1334 = vmatprep.subr.bf16.mxu0 %v949
    %1335 = vmatpush1.bf16.msra.mxu0 %v948
    %1336 = vmatprep.subr.bf16.mxu0 %v945
    %1337 = vmatpush1.bf16.msra.mxu0 %v944
    %1338 = vmatprep.subr.bf16.mxu0 %v941
    %1339 = vmatpush1.bf16.msra.mxu0 %v940
    %1340 = vmatprep.subr.bf16.mxu0 %v937
    %1341 = vmatpush1.bf16.msra.mxu0 %v936
    %1342 = vmatprep.subr.bf16.mxu0 %v933
    %1343 = vmatpush1.bf16.msra.mxu0 %v932
    %1344 = vmatprep.subr.bf16.mxu0 %v993
    %1345 = vmatpush2.bf16.msra.mxu0 %v992
    %1346 = vmatprep.subr.bf16.mxu0 %v989
    %1347 = vmatpush2.bf16.msra.mxu0 %v988
    %1348 = vmatprep.subr.bf16.mxu0 %v985
    %1349 = vmatpush2.bf16.msra.mxu0 %v984
    %1350 = vmatprep.subr.bf16.mxu0 %v981
    %1351 = vmatpush2.bf16.msra.mxu0 %v980
    %1352 = vmatprep.subr.bf16.mxu0 %v977
    %1353 = vmatpush2.bf16.msra.mxu0 %v976
    %1354 = vmatprep.subr.bf16.mxu0 %v973
    %1355 = vmatpush2.bf16.msra.mxu0 %v972
    %1356 = vmatprep.subr.bf16.mxu0 %v969
    %1357 = vmatpush2.bf16.msra.mxu0 %v968
    %1358 = vmatprep.subr.bf16.mxu0 %v965
    %1359 = vmatpush2.bf16.msra.mxu0 %v964
    %1360 = vmatprep.mubr.bf16.mxu0 %v120
    %1361 = vmatmul.mubr.bf16.gmra.mxu0 %v119
    %v1362 = vpop.f32.mrf.mxu0
    %v1363 = vadd.f32 %v327, %v1362
    %v1364 = vpop.f32.mrf.mxu0
    %v1365 = vadd.f32 %v331, %v1364
    %v1366 = vpop.f32.mrf.mxu0
    %v1367 = vpop.f32.mrf.mxu0
    %1368 = vdwg.mxu0
    %1369 = vmatprep.subr.bf16.mxu0 %v1025
    %1370 = vmatpush1.bf16.msra.mxu0 %v1024
    %1371 = vmatprep.subr.bf16.mxu0 %v1021
    %1372 = vmatpush1.bf16.msra.mxu0 %v1020
    %1373 = vmatprep.subr.bf16.mxu0 %v1017
    %1374 = vmatpush1.bf16.msra.mxu0 %v1016
    %1375 = vmatprep.subr.bf16.mxu0 %v1013
    %1376 = vmatpush1.bf16.msra.mxu0 %v1012
    %1377 = vmatprep.subr.bf16.mxu0 %v1009
    %1378 = vmatpush1.bf16.msra.mxu0 %v1008
    %1379 = vmatprep.subr.bf16.mxu0 %v1005
    %1380 = vmatpush1.bf16.msra.mxu0 %v1004
    %1381 = vmatprep.subr.bf16.mxu0 %v1001
    %1382 = vmatpush1.bf16.msra.mxu0 %v1000
    %1383 = vmatprep.subr.bf16.mxu0 %v997
    %1384 = vmatpush1.bf16.msra.mxu0 %v996
    %1385 = vmatprep.subr.bf16.mxu0 %v1057
    %1386 = vmatpush2.bf16.msra.mxu0 %v1056
    %1387 = vmatprep.subr.bf16.mxu0 %v1053
    %1388 = vmatpush2.bf16.msra.mxu0 %v1052
    %1389 = vmatprep.subr.bf16.mxu0 %v1049
    %1390 = vmatpush2.bf16.msra.mxu0 %v1048
    %1391 = vmatprep.subr.bf16.mxu0 %v1045
    %1392 = vmatpush2.bf16.msra.mxu0 %v1044
    %1393 = vmatprep.subr.bf16.mxu0 %v1041
    %1394 = vmatpush2.bf16.msra.mxu0 %v1040
    %1395 = vmatprep.subr.bf16.mxu0 %v1037
    %1396 = vmatpush2.bf16.msra.mxu0 %v1036
    %1397 = vmatprep.subr.bf16.mxu0 %v1033
    %1398 = vmatpush2.bf16.msra.mxu0 %v1032
    %1399 = vmatprep.subr.bf16.mxu0 %v1029
    %1400 = vmatpush2.bf16.msra.mxu0 %v1028
    %1401 = vmatprep.mubr.bf16.mxu0 %v122
    %1402 = vmatmul.mubr.bf16.gmra.mxu0 %v121
    %v1403 = vpop.f32.mrf.mxu0
    %v1404 = vadd.f32 %v1363, %v1403
    %v1405 = vpop.f32.mrf.mxu0
    %v1406 = vadd.f32 %v1365, %v1405
    %v1407 = vpop.f32.mrf.mxu0
    %v1408 = vpop.f32.mrf.mxu0
    %1409 = vdwg.mxu0
    %1410 = vmatprep.subr.bf16.mxu0 %v1089
    %1411 = vmatpush1.bf16.msra.mxu0 %v1088
    %1412 = vmatprep.subr.bf16.mxu0 %v1085
    %1413 = vmatpush1.bf16.msra.mxu0 %v1084
    %1414 = vmatprep.subr.bf16.mxu0 %v1081
    %1415 = vmatpush1.bf16.msra.mxu0 %v1080
    %1416 = vmatprep.subr.bf16.mxu0 %v1077
    %1417 = vmatpush1.bf16.msra.mxu0 %v1076
    %1418 = vmatprep.subr.bf16.mxu0 %v1073
    %1419 = vmatpush1.bf16.msra.mxu0 %v1072
    %1420 = vmatprep.subr.bf16.mxu0 %v1069
    %1421 = vmatpush1.bf16.msra.mxu0 %v1068
    %1422 = vmatprep.subr.bf16.mxu0 %v1065
    %1423 = vmatpush1.bf16.msra.mxu0 %v1064
    %1424 = vmatprep.subr.bf16.mxu0 %v1061
    %1425 = vmatpush1.bf16.msra.mxu0 %v1060
    %1426 = vmatprep.subr.bf16.mxu0 %v1121
    %1427 = vmatpush2.bf16.msra.mxu0 %v1120
    %1428 = vmatprep.subr.bf16.mxu0 %v1117
    %1429 = vmatpush2.bf16.msra.mxu0 %v1116
    %1430 = vmatprep.subr.bf16.mxu0 %v1113
    %1431 = vmatpush2.bf16.msra.mxu0 %v1112
    %1432 = vmatprep.subr.bf16.mxu0 %v1109
    %1433 = vmatpush2.bf16.msra.mxu0 %v1108
    %1434 = vmatprep.subr.bf16.mxu0 %v1105
    %1435 = vmatpush2.bf16.msra.mxu0 %v1104
    %1436 = vmatprep.subr.bf16.mxu0 %v1101
    %1437 = vmatpush2.bf16.msra.mxu0 %v1100
    %1438 = vmatprep.subr.bf16.mxu0 %v1097
    %1439 = vmatpush2.bf16.msra.mxu0 %v1096
    %1440 = vmatprep.subr.bf16.mxu0 %v1093
    %1441 = vmatpush2.bf16.msra.mxu0 %v1092
    %1442 = vmatprep.mubr.bf16.mxu0 %v124
    %1443 = vmatmul.mubr.bf16.gmra.mxu0 %v123
    %v1444 = vpop.f32.mrf.mxu0
    %v1445 = vadd.f32 %v1404, %v1444
    %v1446 = vpop.f32.mrf.mxu0
    %v1447 = vadd.f32 %v1406, %v1446
    %v1448 = vpop.f32.mrf.mxu0
    %v1449 = vpop.f32.mrf.mxu0
    %1450 = vdwg.mxu0
    %1451 = vmatprep.subr.bf16.mxu0 0
    %1452 = vmatpush1.bf16.msra.mxu0 0
    %1453 = vmatprep.subr.bf16.mxu0 0
    %1454 = vmatpush1.bf16.msra.mxu0 0
    %1455 = vmatprep.subr.bf16.mxu0 0
    %1456 = vmatpush1.bf16.msra.mxu0 0
    %1457 = vmatprep.subr.bf16.mxu0 0
    %1458 = vmatpush1.bf16.msra.mxu0 0
    %1459 = vmatprep.subr.bf16.mxu0 0
    %1460 = vmatpush1.bf16.msra.mxu0 0
    %1461 = vmatprep.subr.bf16.mxu0 0
    %1462 = vmatpush1.bf16.msra.mxu0 0
    %1463 = vmatprep.subr.bf16.mxu0 0
    %1464 = vmatpush1.bf16.msra.mxu0 0
    %1465 = vmatprep.subr.bf16.mxu0 %v1125
    %1466 = vmatpush1.bf16.msra.mxu0 %v1124
    %1467 = vmatprep.subr.bf16.mxu0 0
    %1468 = vmatpush2.bf16.msra.mxu0 0
    %1469 = vmatprep.subr.bf16.mxu0 0
    %1470 = vmatpush2.bf16.msra.mxu0 0
    %1471 = vmatprep.subr.bf16.mxu0 0
    %1472 = vmatpush2.bf16.msra.mxu0 0
    %1473 = vmatprep.subr.bf16.mxu0 0
    %1474 = vmatpush2.bf16.msra.mxu0 0
    %1475 = vmatprep.subr.bf16.mxu0 0
    %1476 = vmatpush2.bf16.msra.mxu0 0
    %1477 = vmatprep.subr.bf16.mxu0 0
    %1478 = vmatpush2.bf16.msra.mxu0 0
    %1479 = vmatprep.subr.bf16.mxu0 0
    %1480 = vmatpush2.bf16.msra.mxu0 0
    %1481 = vmatprep.subr.bf16.mxu0 0
    %1482 = vmatpush2.bf16.msra.mxu0 0
    %1483 = vmatprep.mubr.bf16.mxu0 0
    %1484 = vmatmul.mubr.bf16.gmra.mxu0 %v1326
    %v1485 = vpop.f32.mrf.mxu0
    %v1486 = vadd.f32 %v1445, %v1485
    %v1487 = vpop.f32.mrf.mxu0
    %v1488 = vadd.f32 %v1447, %v1487
    %v1489 = vpop.f32.mrf.mxu0
    %v1490 = vpop.f32.mrf.mxu0
    %1491 = vdwg.mxu0
    %1492 = vmatprep.subr.bf16.mxu0 %v963
    %1493 = vmatpush1.bf16.msra.mxu0 %v962
    %1494 = vmatprep.subr.bf16.mxu0 %v959
    %1495 = vmatpush1.bf16.msra.mxu0 %v958
    %1496 = vmatprep.subr.bf16.mxu0 %v955
    %1497 = vmatpush1.bf16.msra.mxu0 %v954
    %1498 = vmatprep.subr.bf16.mxu0 %v951
    %1499 = vmatpush1.bf16.msra.mxu0 %v950
    %1500 = vmatprep.subr.bf16.mxu0 %v947
    %1501 = vmatpush1.bf16.msra.mxu0 %v946
    %1502 = vmatprep.subr.bf16.mxu0 %v943
    %1503 = vmatpush1.bf16.msra.mxu0 %v942
    %1504 = vmatprep.subr.bf16.mxu0 %v939
    %1505 = vmatpush1.bf16.msra.mxu0 %v938
    %1506 = vmatprep.subr.bf16.mxu0 %v935
    %1507 = vmatpush1.bf16.msra.mxu0 %v934
    %1508 = vmatprep.subr.bf16.mxu0 %v995
    %1509 = vmatpush2.bf16.msra.mxu0 %v994
    %1510 = vmatprep.subr.bf16.mxu0 %v991
    %1511 = vmatpush2.bf16.msra.mxu0 %v990
    %1512 = vmatprep.subr.bf16.mxu0 %v987
    %1513 = vmatpush2.bf16.msra.mxu0 %v986
    %1514 = vmatprep.subr.bf16.mxu0 %v983
    %1515 = vmatpush2.bf16.msra.mxu0 %v982
    %1516 = vmatprep.subr.bf16.mxu0 %v979
    %1517 = vmatpush2.bf16.msra.mxu0 %v978
    %1518 = vmatprep.subr.bf16.mxu0 %v975
    %1519 = vmatpush2.bf16.msra.mxu0 %v974
    %1520 = vmatprep.subr.bf16.mxu0 %v971
    %1521 = vmatpush2.bf16.msra.mxu0 %v970
    %1522 = vmatprep.subr.bf16.mxu0 %v967
    %1523 = vmatpush2.bf16.msra.mxu0 %v966
    %1524 = vmatprep.mubr.bf16.mxu0 %v120
    %1525 = vmatmul.mubr.bf16.gmra.mxu0 %v119
    %v1526 = vpop.f32.mrf.mxu0
    %v1527 = vadd.f32 %v335, %v1526
    %v1528 = vpop.f32.mrf.mxu0
    %v1529 = vadd.f32 %v339, %v1528
    %v1530 = vpop.f32.mrf.mxu0
    %v1531 = vpop.f32.mrf.mxu0
    %1532 = vdwg.mxu0
    %1533 = vmatprep.subr.bf16.mxu0 %v1027
    %1534 = vmatpush1.bf16.msra.mxu0 %v1026
    %1535 = vmatprep.subr.bf16.mxu0 %v1023
    %1536 = vmatpush1.bf16.msra.mxu0 %v1022
    %1537 = vmatprep.subr.bf16.mxu0 %v1019
    %1538 = vmatpush1.bf16.msra.mxu0 %v1018
    %1539 = vmatprep.subr.bf16.mxu0 %v1015
    %1540 = vmatpush1.bf16.msra.mxu0 %v1014
    %1541 = vmatprep.subr.bf16.mxu0 %v1011
    %1542 = vmatpush1.bf16.msra.mxu0 %v1010
    %1543 = vmatprep.subr.bf16.mxu0 %v1007
    %1544 = vmatpush1.bf16.msra.mxu0 %v1006
    %1545 = vmatprep.subr.bf16.mxu0 %v1003
    %1546 = vmatpush1.bf16.msra.mxu0 %v1002
    %1547 = vmatprep.subr.bf16.mxu0 %v999
    %1548 = vmatpush1.bf16.msra.mxu0 %v998
    %1549 = vmatprep.subr.bf16.mxu0 %v1059
    %1550 = vmatpush2.bf16.msra.mxu0 %v1058
    %1551 = vmatprep.subr.bf16.mxu0 %v1055
    %1552 = vmatpush2.bf16.msra.mxu0 %v1054
    %1553 = vmatprep.subr.bf16.mxu0 %v1051
    %1554 = vmatpush2.bf16.msra.mxu0 %v1050
    %1555 = vmatprep.subr.bf16.mxu0 %v1047
    %1556 = vmatpush2.bf16.msra.mxu0 %v1046
    %1557 = vmatprep.subr.bf16.mxu0 %v1043
    %1558 = vmatpush2.bf16.msra.mxu0 %v1042
    %1559 = vmatprep.subr.bf16.mxu0 %v1039
    %1560 = vmatpush2.bf16.msra.mxu0 %v1038
    %1561 = vmatprep.subr.bf16.mxu0 %v1035
    %1562 = vmatpush2.bf16.msra.mxu0 %v1034
    %1563 = vmatprep.subr.bf16.mxu0 %v1031
    %1564 = vmatpush2.bf16.msra.mxu0 %v1030
    %1565 = vmatprep.mubr.bf16.mxu0 %v122
    %1566 = vmatmul.mubr.bf16.gmra.mxu0 %v121
    %v1567 = vpop.f32.mrf.mxu0
    %v1568 = vadd.f32 %v1527, %v1567
    %v1569 = vpop.f32.mrf.mxu0
    %v1570 = vadd.f32 %v1529, %v1569
    %v1571 = vpop.f32.mrf.mxu0
    %v1572 = vpop.f32.mrf.mxu0
    %1573 = vdwg.mxu0
    %1574 = vmatprep.subr.bf16.mxu0 %v1091
    %1575 = vmatpush1.bf16.msra.mxu0 %v1090
    %1576 = vmatprep.subr.bf16.mxu0 %v1087
    %1577 = vmatpush1.bf16.msra.mxu0 %v1086
    %1578 = vmatprep.subr.bf16.mxu0 %v1083
    %1579 = vmatpush1.bf16.msra.mxu0 %v1082
    %1580 = vmatprep.subr.bf16.mxu0 %v1079
    %1581 = vmatpush1.bf16.msra.mxu0 %v1078
    %1582 = vmatprep.subr.bf16.mxu0 %v1075
    %1583 = vmatpush1.bf16.msra.mxu0 %v1074
    %1584 = vmatprep.subr.bf16.mxu0 %v1071
    %1585 = vmatpush1.bf16.msra.mxu0 %v1070
    %1586 = vmatprep.subr.bf16.mxu0 %v1067
    %1587 = vmatpush1.bf16.msra.mxu0 %v1066
    %1588 = vmatprep.subr.bf16.mxu0 %v1063
    %1589 = vmatpush1.bf16.msra.mxu0 %v1062
    %1590 = vmatprep.subr.bf16.mxu0 %v1123
    %1591 = vmatpush2.bf16.msra.mxu0 %v1122
    %1592 = vmatprep.subr.bf16.mxu0 %v1119
    %1593 = vmatpush2.bf16.msra.mxu0 %v1118
    %1594 = vmatprep.subr.bf16.mxu0 %v1115
    %1595 = vmatpush2.bf16.msra.mxu0 %v1114
    %1596 = vmatprep.subr.bf16.mxu0 %v1111
    %1597 = vmatpush2.bf16.msra.mxu0 %v1110
    %1598 = vmatprep.subr.bf16.mxu0 %v1107
    %1599 = vmatpush2.bf16.msra.mxu0 %v1106
    %1600 = vmatprep.subr.bf16.mxu0 %v1103
    %1601 = vmatpush2.bf16.msra.mxu0 %v1102
    %1602 = vmatprep.subr.bf16.mxu0 %v1099
    %1603 = vmatpush2.bf16.msra.mxu0 %v1098
    %1604 = vmatprep.subr.bf16.mxu0 %v1095
    %1605 = vmatpush2.bf16.msra.mxu0 %v1094
    %1606 = vmatprep.mubr.bf16.mxu0 %v124
    %1607 = vmatmul.mubr.bf16.gmra.mxu0 %v123
    %v1608 = vpop.f32.mrf.mxu0
    %v1609 = vadd.f32 %v1568, %v1608
    %v1610 = vpop.f32.mrf.mxu0
    %v1611 = vadd.f32 %v1570, %v1610
    %v1612 = vpop.f32.mrf.mxu0
    %v1613 = vpop.f32.mrf.mxu0
    %1614 = vdwg.mxu0
    %1615 = vmatprep.subr.bf16.mxu0 0
    %1616 = vmatpush1.bf16.msra.mxu0 0
    %1617 = vmatprep.subr.bf16.mxu0 0
    %1618 = vmatpush1.bf16.msra.mxu0 0
    %1619 = vmatprep.subr.bf16.mxu0 0
    %1620 = vmatpush1.bf16.msra.mxu0 0
    %1621 = vmatprep.subr.bf16.mxu0 0
    %1622 = vmatpush1.bf16.msra.mxu0 0
    %1623 = vmatprep.subr.bf16.mxu0 0
    %1624 = vmatpush1.bf16.msra.mxu0 0
    %1625 = vmatprep.subr.bf16.mxu0 0
    %1626 = vmatpush1.bf16.msra.mxu0 0
    %1627 = vmatprep.subr.bf16.mxu0 0
    %1628 = vmatpush1.bf16.msra.mxu0 0
    %1629 = vmatprep.subr.bf16.mxu0 %v1127
    %1630 = vmatpush1.bf16.msra.mxu0 %v1126
    %1631 = vmatprep.subr.bf16.mxu0 0
    %1632 = vmatpush2.bf16.msra.mxu0 0
    %1633 = vmatprep.subr.bf16.mxu0 0
    %1634 = vmatpush2.bf16.msra.mxu0 0
    %1635 = vmatprep.subr.bf16.mxu0 0
    %1636 = vmatpush2.bf16.msra.mxu0 0
    %1637 = vmatprep.subr.bf16.mxu0 0
    %1638 = vmatpush2.bf16.msra.mxu0 0
    %1639 = vmatprep.subr.bf16.mxu0 0
    %1640 = vmatpush2.bf16.msra.mxu0 0
    %1641 = vmatprep.subr.bf16.mxu0 0
    %1642 = vmatpush2.bf16.msra.mxu0 0
    %1643 = vmatprep.subr.bf16.mxu0 0
    %1644 = vmatpush2.bf16.msra.mxu0 0
    %1645 = vmatprep.subr.bf16.mxu0 0
    %1646 = vmatpush2.bf16.msra.mxu0 0
    %1647 = vmatprep.mubr.bf16.mxu0 0
    %1648 = vmatmul.mubr.bf16.gmra.mxu0 %v1326
    %v1649 = vpop.f32.mrf.mxu0
    %v1650 = vadd.f32 %v1609, %v1649
    %v1651 = vpop.f32.mrf.mxu0
    %v1652 = vadd.f32 %v1611, %v1651
    %v1653 = vpop.f32.mrf.mxu0
    %v1654 = vpop.f32.mrf.mxu0
    %1655 = vdwg.mxu0
    %v1656 = vmax.f32 %v1486, 0.0
    %v1657 = vmax.f32 %v1488, 0.0
    %v1658 = vmax.f32 %v1650, 0.0
    %v1659 = vmax.f32 %v1652, 0.0
    %v1660 = vpack.c.bf16 %v1656, %v1656
    %v1661 = vpack.c.bf16 %v1657, %v1657
    %v1662 = vpack.c.bf16 %v1658, %v1658
    %v1663 = vpack.c.bf16 %v1659, %v1659
    %v1664 = vld [vmem:[#allocation8] sm:$0xff]
    %v1665 = vld [vmem:[#allocation8 + $0x8] sm:$0xff]
    %v1666 = vld [vmem:[#allocation8 + $0x10] sm:$0xff]
    %v1667 = vld [vmem:[#allocation8 + $0x18] sm:$0xff]
    %v1668 = vld [vmem:[#allocation8 + $0x20] sm:$0xff]
    %v1669 = vld [vmem:[#allocation8 + $0x28] sm:$0xff]
    %v1670 = vld [vmem:[#allocation8 + $0x30] sm:$0xff]
    %v1671 = vld [vmem:[#allocation8 + $0x38] sm:$0xff]
    %v1672 = vld [vmem:[#allocation8 + $0x40] sm:$0xff]
    %v1673 = vld [vmem:[#allocation8 + $0x48] sm:$0xff]
    %v1674 = vld [vmem:[#allocation8 + $0x50] sm:$0xff]
    %v1675 = vld [vmem:[#allocation8 + $0x58] sm:$0xff]
    %v1676 = vld [vmem:[#allocation8 + $0x60] sm:$0xff]
    %v1677 = vld [vmem:[#allocation8 + $0x68] sm:$0xff]
    %v1678 = vld [vmem:[#allocation8 + $0x70] sm:$0xff]
    %v1679 = vld [vmem:[#allocation8 + $0x78] sm:$0xff]
    %v1680 = vld [vmem:[#allocation8 + $0x80] sm:$0xff]
    %v1681 = vld [vmem:[#allocation8 + $0x88] sm:$0xff]
    %v1682 = vld [vmem:[#allocation8 + $0x90] sm:$0xff]
    %v1683 = vld [vmem:[#allocation8 + $0x98] sm:$0xff]
    %v1684 = vld [vmem:[#allocation8 + $0xa0] sm:$0xff]
    %v1685 = vld [vmem:[#allocation8 + $0xa8] sm:$0xff]
    %v1686 = vld [vmem:[#allocation8 + $0xb0] sm:$0xff]
    %v1687 = vld [vmem:[#allocation8 + $0xb8] sm:$0xff]
    %v1688 = vld [vmem:[#allocation8 + $0xc0] sm:$0xff]
    %v1689 = vld [vmem:[#allocation8 + $0xc8] sm:$0xff]
    %v1690 = vld [vmem:[#allocation8 + $0xd0] sm:$0xff]
    %v1691 = vld [vmem:[#allocation8 + $0xd8] sm:$0xff]
    %v1692 = vld [vmem:[#allocation8 + $0xe0] sm:$0xff]
    %v1693 = vld [vmem:[#allocation8 + $0xe8] sm:$0xff]
    %v1694 = vld [vmem:[#allocation8 + $0xf0] sm:$0xff]
    %v1695 = vld [vmem:[#allocation8 + $0xf8] sm:$0xff]
    %v1696 = vld [vmem:[#allocation8 + $0x100] sm:$0xff]
    %v1697 = vld [vmem:[#allocation8 + $0x108] sm:$0xff]
    %v1698 = vld [vmem:[#allocation8 + $0x110] sm:$0xff]
    %v1699 = vld [vmem:[#allocation8 + $0x118] sm:$0xff]
    %v1700 = vld [vmem:[#allocation8 + $0x120] sm:$0xff]
    %v1701 = vld [vmem:[#allocation8 + $0x128] sm:$0xff]
    %v1702 = vld [vmem:[#allocation8 + $0x130] sm:$0xff]
    %v1703 = vld [vmem:[#allocation8 + $0x138] sm:$0xff]
    %v1704 = vld [vmem:[#allocation8 + $0x140] sm:$0xff]
    %v1705 = vld [vmem:[#allocation8 + $0x148] sm:$0xff]
    %v1706 = vld [vmem:[#allocation8 + $0x150] sm:$0xff]
    %v1707 = vld [vmem:[#allocation8 + $0x158] sm:$0xff]
    %v1708 = vld [vmem:[#allocation8 + $0x160] sm:$0xff]
    %v1709 = vld [vmem:[#allocation8 + $0x168] sm:$0xff]
    %v1710 = vld [vmem:[#allocation8 + $0x170] sm:$0xff]
    %v1711 = vld [vmem:[#allocation8 + $0x178] sm:$0xff]
    %v1712 = vld [vmem:[#allocation8 + $0x180] sm:$0xff]
    %v1713 = vld [vmem:[#allocation8 + $0x188] sm:$0xff]
    %v1714 = vld [vmem:[#allocation8 + $0x190] sm:$0xff]
    %v1715 = vld [vmem:[#allocation8 + $0x198] sm:$0xff]
    %v1716 = vld [vmem:[#allocation8 + $0x1a0] sm:$0xff]
    %v1717 = vld [vmem:[#allocation8 + $0x1a8] sm:$0xff]
    %v1718 = vld [vmem:[#allocation8 + $0x1b0] sm:$0xff]
    %v1719 = vld [vmem:[#allocation8 + $0x1b8] sm:$0xff]
    %v1720 = vld [vmem:[#allocation8 + $0x1c0] sm:$0xff]
    %v1721 = vld [vmem:[#allocation8 + $0x1c8] sm:$0xff]
    %v1722 = vld [vmem:[#allocation8 + $0x1d0] sm:$0xff]
    %v1723 = vld [vmem:[#allocation8 + $0x1d8] sm:$0xff]
    %v1724 = vld [vmem:[#allocation8 + $0x1e0] sm:$0xff]
    %v1725 = vld [vmem:[#allocation8 + $0x1e8] sm:$0xff]
    %v1726 = vld [vmem:[#allocation8 + $0x1f0] sm:$0xff]
    %v1727 = vld [vmem:[#allocation8 + $0x1f8] sm:$0xff]
    %v1728 = vld [vmem:[%s4] sm:$0x3]
    %v1730 = vlaneseq
    %v1731 = vshrl.u32 %v1730, 7
    %v1732 = vsub.s32 0, %v1731
    %v1733 = vrot.slane %v1728, %v1732
    %v1734 = vlaneseq
    %v1735 = vshrl.u32 %v1734, 7
    %v1736 = vsub.s32 1, %v1735
    %v1737 = vrot.slane %v1728, %v1736
    %v1804 = vunpack.c.l.b16 %v1664
    %v1805 = vunpack.c.h.b16 %v1664
    %v1806 = vunpack.c.l.b16 %v1665
    %v1807 = vunpack.c.h.b16 %v1665
    %v1808 = vunpack.c.l.b16 %v1666
    %v1809 = vunpack.c.h.b16 %v1666
    %v1810 = vunpack.c.l.b16 %v1667
    %v1811 = vunpack.c.h.b16 %v1667
    %v1812 = vunpack.c.l.b16 %v1668
    %v1813 = vunpack.c.h.b16 %v1668
    %v1814 = vunpack.c.l.b16 %v1669
    %v1815 = vunpack.c.h.b16 %v1669
    %v1816 = vunpack.c.l.b16 %v1670
    %v1817 = vunpack.c.h.b16 %v1670
    %v1818 = vunpack.c.l.b16 %v1671
    %v1819 = vunpack.c.h.b16 %v1671
    %v1820 = vunpack.c.l.b16 %v1672
    %v1821 = vunpack.c.h.b16 %v1672
    %v1822 = vunpack.c.l.b16 %v1673
    %v1823 = vunpack.c.h.b16 %v1673
    %v1824 = vunpack.c.l.b16 %v1674
    %v1825 = vunpack.c.h.b16 %v1674
    %v1826 = vunpack.c.l.b16 %v1675
    %v1827 = vunpack.c.h.b16 %v1675
    %v1828 = vunpack.c.l.b16 %v1676
    %v1829 = vunpack.c.h.b16 %v1676
    %v1830 = vunpack.c.l.b16 %v1677
    %v1831 = vunpack.c.h.b16 %v1677
    %v1832 = vunpack.c.l.b16 %v1678
    %v1833 = vunpack.c.h.b16 %v1678
    %v1834 = vunpack.c.l.b16 %v1679
    %v1835 = vunpack.c.h.b16 %v1679
    %v1836 = vunpack.c.l.b16 %v1680
    %v1837 = vunpack.c.h.b16 %v1680
    %v1838 = vunpack.c.l.b16 %v1681
    %v1839 = vunpack.c.h.b16 %v1681
    %v1840 = vunpack.c.l.b16 %v1682
    %v1841 = vunpack.c.h.b16 %v1682
    %v1842 = vunpack.c.l.b16 %v1683
    %v1843 = vunpack.c.h.b16 %v1683
    %v1844 = vunpack.c.l.b16 %v1684
    %v1845 = vunpack.c.h.b16 %v1684
    %v1846 = vunpack.c.l.b16 %v1685
    %v1847 = vunpack.c.h.b16 %v1685
    %v1848 = vunpack.c.l.b16 %v1686
    %v1849 = vunpack.c.h.b16 %v1686
    %v1850 = vunpack.c.l.b16 %v1687
    %v1851 = vunpack.c.h.b16 %v1687
    %v1852 = vunpack.c.l.b16 %v1688
    %v1853 = vunpack.c.h.b16 %v1688
    %v1854 = vunpack.c.l.b16 %v1689
    %v1855 = vunpack.c.h.b16 %v1689
    %v1856 = vunpack.c.l.b16 %v1690
    %v1857 = vunpack.c.h.b16 %v1690
    %v1858 = vunpack.c.l.b16 %v1691
    %v1859 = vunpack.c.h.b16 %v1691
    %v1860 = vunpack.c.l.b16 %v1692
    %v1861 = vunpack.c.h.b16 %v1692
    %v1862 = vunpack.c.l.b16 %v1693
    %v1863 = vunpack.c.h.b16 %v1693
    %v1864 = vunpack.c.l.b16 %v1694
    %v1865 = vunpack.c.h.b16 %v1694
    %v1866 = vunpack.c.l.b16 %v1695
    %v1867 = vunpack.c.h.b16 %v1695
    %v1868 = vunpack.c.l.b16 %v1696
    %v1869 = vunpack.c.h.b16 %v1696
    %v1870 = vunpack.c.l.b16 %v1697
    %v1871 = vunpack.c.h.b16 %v1697
    %v1872 = vunpack.c.l.b16 %v1698
    %v1873 = vunpack.c.h.b16 %v1698
    %v1874 = vunpack.c.l.b16 %v1699
    %v1875 = vunpack.c.h.b16 %v1699
    %v1876 = vunpack.c.l.b16 %v1700
    %v1877 = vunpack.c.h.b16 %v1700
    %v1878 = vunpack.c.l.b16 %v1701
    %v1879 = vunpack.c.h.b16 %v1701
    %v1880 = vunpack.c.l.b16 %v1702
    %v1881 = vunpack.c.h.b16 %v1702
    %v1882 = vunpack.c.l.b16 %v1703
    %v1883 = vunpack.c.h.b16 %v1703
    %v1884 = vunpack.c.l.b16 %v1704
    %v1885 = vunpack.c.h.b16 %v1704
    %v1886 = vunpack.c.l.b16 %v1705
    %v1887 = vunpack.c.h.b16 %v1705
    %v1888 = vunpack.c.l.b16 %v1706
    %v1889 = vunpack.c.h.b16 %v1706
    %v1890 = vunpack.c.l.b16 %v1707
    %v1891 = vunpack.c.h.b16 %v1707
    %v1892 = vunpack.c.l.b16 %v1708
    %v1893 = vunpack.c.h.b16 %v1708
    %v1894 = vunpack.c.l.b16 %v1709
    %v1895 = vunpack.c.h.b16 %v1709
    %v1896 = vunpack.c.l.b16 %v1710
    %v1897 = vunpack.c.h.b16 %v1710
    %v1898 = vunpack.c.l.b16 %v1711
    %v1899 = vunpack.c.h.b16 %v1711
    %v1900 = vunpack.c.l.b16 %v1712
    %v1901 = vunpack.c.h.b16 %v1712
    %v1902 = vunpack.c.l.b16 %v1713
    %v1903 = vunpack.c.h.b16 %v1713
    %v1904 = vunpack.c.l.b16 %v1714
    %v1905 = vunpack.c.h.b16 %v1714
    %v1906 = vunpack.c.l.b16 %v1715
    %v1907 = vunpack.c.h.b16 %v1715
    %v1908 = vunpack.c.l.b16 %v1716
    %v1909 = vunpack.c.h.b16 %v1716
    %v1910 = vunpack.c.l.b16 %v1717
    %v1911 = vunpack.c.h.b16 %v1717
    %v1912 = vunpack.c.l.b16 %v1718
    %v1913 = vunpack.c.h.b16 %v1718
    %v1914 = vunpack.c.l.b16 %v1719
    %v1915 = vunpack.c.h.b16 %v1719
    %v1916 = vunpack.c.l.b16 %v1720
    %v1917 = vunpack.c.h.b16 %v1720
    %v1918 = vunpack.c.l.b16 %v1721
    %v1919 = vunpack.c.h.b16 %v1721
    %v1920 = vunpack.c.l.b16 %v1722
    %v1921 = vunpack.c.h.b16 %v1722
    %v1922 = vunpack.c.l.b16 %v1723
    %v1923 = vunpack.c.h.b16 %v1723
    %v1924 = vunpack.c.l.b16 %v1724
    %v1925 = vunpack.c.h.b16 %v1724
    %v1926 = vunpack.c.l.b16 %v1725
    %v1927 = vunpack.c.h.b16 %v1725
    %v1928 = vunpack.c.l.b16 %v1726
    %v1929 = vunpack.c.h.b16 %v1726
    %v1930 = vunpack.c.l.b16 %v1727
    %v1931 = vunpack.c.h.b16 %v1727
    %v1932 = vpack.c.b16 %v1806, %v1804
    %v1933 = vpack.c.b16 %v1807, %v1805
    %v1934 = vpack.c.b16 %v1810, %v1808
    %v1935 = vpack.c.b16 %v1811, %v1809
    %v1936 = vpack.c.b16 %v1814, %v1812
    %v1937 = vpack.c.b16 %v1815, %v1813
    %v1938 = vpack.c.b16 %v1818, %v1816
    %v1939 = vpack.c.b16 %v1819, %v1817
    %v1940 = vpack.c.b16 %v1822, %v1820
    %v1941 = vpack.c.b16 %v1823, %v1821
    %v1942 = vpack.c.b16 %v1826, %v1824
    %v1943 = vpack.c.b16 %v1827, %v1825
    %v1944 = vpack.c.b16 %v1830, %v1828
    %v1945 = vpack.c.b16 %v1831, %v1829
    %v1946 = vpack.c.b16 %v1834, %v1832
    %v1947 = vpack.c.b16 %v1835, %v1833
    %v1948 = vpack.c.b16 %v1838, %v1836
    %v1949 = vpack.c.b16 %v1839, %v1837
    %v1950 = vpack.c.b16 %v1842, %v1840
    %v1951 = vpack.c.b16 %v1843, %v1841
    %v1952 = vpack.c.b16 %v1846, %v1844
    %v1953 = vpack.c.b16 %v1847, %v1845
    %v1954 = vpack.c.b16 %v1850, %v1848
    %v1955 = vpack.c.b16 %v1851, %v1849
    %v1956 = vpack.c.b16 %v1854, %v1852
    %v1957 = vpack.c.b16 %v1855, %v1853
    %v1958 = vpack.c.b16 %v1858, %v1856
    %v1959 = vpack.c.b16 %v1859, %v1857
    %v1960 = vpack.c.b16 %v1862, %v1860
    %v1961 = vpack.c.b16 %v1863, %v1861
    %v1962 = vpack.c.b16 %v1866, %v1864
    %v1963 = vpack.c.b16 %v1867, %v1865
    %v1964 = vpack.c.b16 %v1870, %v1868
    %v1965 = vpack.c.b16 %v1871, %v1869
    %v1966 = vpack.c.b16 %v1874, %v1872
    %v1967 = vpack.c.b16 %v1875, %v1873
    %v1968 = vpack.c.b16 %v1878, %v1876
    %v1969 = vpack.c.b16 %v1879, %v1877
    %v1970 = vpack.c.b16 %v1882, %v1880
    %v1971 = vpack.c.b16 %v1883, %v1881
    %v1972 = vpack.c.b16 %v1886, %v1884
    %v1973 = vpack.c.b16 %v1887, %v1885
    %v1974 = vpack.c.b16 %v1890, %v1888
    %v1975 = vpack.c.b16 %v1891, %v1889
    %v1976 = vpack.c.b16 %v1894, %v1892
    %v1977 = vpack.c.b16 %v1895, %v1893
    %v1978 = vpack.c.b16 %v1898, %v1896
    %v1979 = vpack.c.b16 %v1899, %v1897
    %v1980 = vpack.c.b16 %v1902, %v1900
    %v1981 = vpack.c.b16 %v1903, %v1901
    %v1982 = vpack.c.b16 %v1906, %v1904
    %v1983 = vpack.c.b16 %v1907, %v1905
    %v1984 = vpack.c.b16 %v1910, %v1908
    %v1985 = vpack.c.b16 %v1911, %v1909
    %v1986 = vpack.c.b16 %v1914, %v1912
    %v1987 = vpack.c.b16 %v1915, %v1913
    %v1988 = vpack.c.b16 %v1918, %v1916
    %v1989 = vpack.c.b16 %v1919, %v1917
    %v1990 = vpack.c.b16 %v1922, %v1920
    %v1991 = vpack.c.b16 %v1923, %v1921
    %v1992 = vpack.c.b16 %v1926, %v1924
    %v1993 = vpack.c.b16 %v1927, %v1925
    %v1994 = vpack.c.b16 %v1930, %v1928
    %v1995 = vpack.c.b16 %v1931, %v1929
    %2060 = vmatprep.subr.bf16.mxu0 %v1947
    %2061 = vmatpush1.bf16.msra.mxu0 %v1946
    %2062 = vmatprep.subr.bf16.mxu0 %v1945
    %2063 = vmatpush1.bf16.msra.mxu0 %v1944
    %2064 = vmatprep.subr.bf16.mxu0 %v1943
    %2065 = vmatpush1.bf16.msra.mxu0 %v1942
    %2066 = vmatprep.subr.bf16.mxu0 %v1941
    %2067 = vmatpush1.bf16.msra.mxu0 %v1940
    %2068 = vmatprep.subr.bf16.mxu0 %v1939
    %2069 = vmatpush1.bf16.msra.mxu0 %v1938
    %2070 = vmatprep.subr.bf16.mxu0 %v1937
    %2071 = vmatpush1.bf16.msra.mxu0 %v1936
    %2072 = vmatprep.subr.bf16.mxu0 %v1935
    %2073 = vmatpush1.bf16.msra.mxu0 %v1934
    %2074 = vmatprep.subr.bf16.mxu0 %v1933
    %2075 = vmatpush1.bf16.msra.mxu0 %v1932
    %2076 = vmatprep.subr.bf16.mxu0 %v1963
    %2077 = vmatpush2.bf16.msra.mxu0 %v1962
    %2078 = vmatprep.subr.bf16.mxu0 %v1961
    %2079 = vmatpush2.bf16.msra.mxu0 %v1960
    %2080 = vmatprep.subr.bf16.mxu0 %v1959
    %2081 = vmatpush2.bf16.msra.mxu0 %v1958
    %2082 = vmatprep.subr.bf16.mxu0 %v1957
    %2083 = vmatpush2.bf16.msra.mxu0 %v1956
    %2084 = vmatprep.subr.bf16.mxu0 %v1955
    %2085 = vmatpush2.bf16.msra.mxu0 %v1954
    %2086 = vmatprep.subr.bf16.mxu0 %v1953
    %2087 = vmatpush2.bf16.msra.mxu0 %v1952
    %2088 = vmatprep.subr.bf16.mxu0 %v1951
    %2089 = vmatpush2.bf16.msra.mxu0 %v1950
    %2090 = vmatprep.subr.bf16.mxu0 %v1949
    %2091 = vmatpush2.bf16.msra.mxu0 %v1948
    %2092 = vmatprep.mubr.bf16.mxu0 %v1661
    %2093 = vmatmul.mubr.bf16.gmra.mxu0 %v1660
    %v2094 = vpop.f32.mrf.mxu0
    %v2095 = vadd.f32 %v1733, %v2094
    %v2096 = vpop.f32.mrf.mxu0
    %v2097 = vadd.f32 %v1737, %v2096
    %v2098 = vpop.f32.mrf.mxu0
    %v2099 = vpop.f32.mrf.mxu0
    %2100 = vdwg.mxu0
    %2101 = vmatprep.subr.bf16.mxu0 %v1979
    %2102 = vmatpush1.bf16.msra.mxu0 %v1978
    %2103 = vmatprep.subr.bf16.mxu0 %v1977
    %2104 = vmatpush1.bf16.msra.mxu0 %v1976
    %2105 = vmatprep.subr.bf16.mxu0 %v1975
    %2106 = vmatpush1.bf16.msra.mxu0 %v1974
    %2107 = vmatprep.subr.bf16.mxu0 %v1973
    %2108 = vmatpush1.bf16.msra.mxu0 %v1972
    %2109 = vmatprep.subr.bf16.mxu0 %v1971
    %2110 = vmatpush1.bf16.msra.mxu0 %v1970
    %2111 = vmatprep.subr.bf16.mxu0 %v1969
    %2112 = vmatpush1.bf16.msra.mxu0 %v1968
    %2113 = vmatprep.subr.bf16.mxu0 %v1967
    %2114 = vmatpush1.bf16.msra.mxu0 %v1966
    %2115 = vmatprep.subr.bf16.mxu0 %v1965
    %2116 = vmatpush1.bf16.msra.mxu0 %v1964
    %2117 = vmatprep.subr.bf16.mxu0 %v1995
    %2118 = vmatpush2.bf16.msra.mxu0 %v1994
    %2119 = vmatprep.subr.bf16.mxu0 %v1993
    %2120 = vmatpush2.bf16.msra.mxu0 %v1992
    %2121 = vmatprep.subr.bf16.mxu0 %v1991
    %2122 = vmatpush2.bf16.msra.mxu0 %v1990
    %2123 = vmatprep.subr.bf16.mxu0 %v1989
    %2124 = vmatpush2.bf16.msra.mxu0 %v1988
    %2125 = vmatprep.subr.bf16.mxu0 %v1987
    %2126 = vmatpush2.bf16.msra.mxu0 %v1986
    %2127 = vmatprep.subr.bf16.mxu0 %v1985
    %2128 = vmatpush2.bf16.msra.mxu0 %v1984
    %2129 = vmatprep.subr.bf16.mxu0 %v1983
    %2130 = vmatpush2.bf16.msra.mxu0 %v1982
    %2131 = vmatprep.subr.bf16.mxu0 %v1981
    %2132 = vmatpush2.bf16.msra.mxu0 %v1980
    %2133 = vmatprep.mubr.bf16.mxu0 %v1663
    %2134 = vmatmul.mubr.bf16.gmra.mxu0 %v1662
    %v2135 = vpop.f32.mrf.mxu0
    %v2136 = vadd.f32 %v2095, %v2135
    %v2137 = vpop.f32.mrf.mxu0
    %v2138 = vadd.f32 %v2097, %v2137
    %v2139 = vpop.f32.mrf.mxu0
    %v2140 = vpop.f32.mrf.mxu0
    %2141 = vdwg.mxu0
    %v2142 = vmax.f32 %v2136, 0.0
    %v2143 = vmax.f32 %v2138, 0.0
    %v2144 = vpack.c.bf16 %v2142, %v2142
    %v2145 = vpack.c.bf16 %v2143, %v2143
    %v2146 = vld [vmem:[#allocation10] sm:$0xf]
    %v2147 = vld [vmem:[#allocation10 + $0x4] sm:$0xf]
    %v2148 = vld [vmem:[#allocation10 + $0x8] sm:$0xf]
    %v2149 = vld [vmem:[#allocation10 + $0xc] sm:$0xf]
    %v2150 = vld [vmem:[#allocation10 + $0x10] sm:$0xf]
    %v2151 = vld [vmem:[#allocation10 + $0x14] sm:$0xf]
    %v2152 = vld [vmem:[#allocation10 + $0x18] sm:$0xf]
    %v2153 = vld [vmem:[#allocation10 + $0x1c] sm:$0xf]
    %v2154 = vld [vmem:[#allocation10 + $0x20] sm:$0xf]
    %v2155 = vld [vmem:[#allocation10 + $0x24] sm:$0xf]
    %v2156 = vld [vmem:[#allocation10 + $0x28] sm:$0xf]
    %v2157 = vld [vmem:[#allocation10 + $0x2c] sm:$0xf]
    %v2158 = vld [vmem:[#allocation10 + $0x30] sm:$0xf]
    %v2159 = vld [vmem:[#allocation10 + $0x34] sm:$0xf]
    %v2160 = vld [vmem:[#allocation10 + $0x38] sm:$0xf]
    %v2161 = vld [vmem:[#allocation10 + $0x3c] sm:$0xf]
    %v2162 = vld [vmem:[#allocation10 + $0x40] sm:$0xf]
    %v2163 = vld [vmem:[#allocation10 + $0x44] sm:$0xf]
    %v2164 = vld [vmem:[#allocation10 + $0x48] sm:$0xf]
    %v2165 = vld [vmem:[#allocation10 + $0x4c] sm:$0xf]
    %v2166 = vld [vmem:[#allocation10 + $0x50] sm:$0xf]
    %v2167 = vld [vmem:[#allocation10 + $0x54] sm:$0xf]
    %v2168 = vld [vmem:[#allocation10 + $0x58] sm:$0xf]
    %v2169 = vld [vmem:[#allocation10 + $0x5c] sm:$0xf]
    %v2170 = vld [vmem:[#allocation10 + $0x60] sm:$0xf]
    %v2171 = vld [vmem:[#allocation10 + $0x64] sm:$0xf]
    %v2172 = vld [vmem:[#allocation10 + $0x68] sm:$0xf]
    %v2173 = vld [vmem:[#allocation10 + $0x6c] sm:$0xf]
    %v2174 = vld [vmem:[#allocation10 + $0x70] sm:$0xf]
    %v2175 = vld [vmem:[#allocation10 + $0x74] sm:$0xf]
    %v2176 = vld [vmem:[#allocation10 + $0x78] sm:$0xf]
    %v2177 = vld [vmem:[#allocation10 + $0x7c] sm:$0xf]
    %v2178 = vld [vmem:[%s6] sm:$0x1]
    %v2180 = vlaneseq
    %v2181 = vshrl.u32 %v2180, 7
    %v2182 = vsub.s32 0, %v2181
    %v2183 = vrot.slane %v2178, %v2182
    %v2217 = vunpack.c.l.b16 %v2146
    %v2218 = vunpack.c.l.b16 %v2147
    %v2219 = vunpack.c.l.b16 %v2148
    %v2220 = vunpack.c.l.b16 %v2149
    %v2221 = vunpack.c.l.b16 %v2150
    %v2222 = vunpack.c.l.b16 %v2151
    %v2223 = vunpack.c.l.b16 %v2152
    %v2224 = vunpack.c.l.b16 %v2153
    %v2225 = vunpack.c.l.b16 %v2154
    %v2226 = vunpack.c.l.b16 %v2155
    %v2227 = vunpack.c.l.b16 %v2156
    %v2228 = vunpack.c.l.b16 %v2157
    %v2229 = vunpack.c.l.b16 %v2158
    %v2230 = vunpack.c.l.b16 %v2159
    %v2231 = vunpack.c.l.b16 %v2160
    %v2232 = vunpack.c.l.b16 %v2161
    %v2233 = vunpack.c.l.b16 %v2162
    %v2234 = vunpack.c.l.b16 %v2163
    %v2235 = vunpack.c.l.b16 %v2164
    %v2236 = vunpack.c.l.b16 %v2165
    %v2237 = vunpack.c.l.b16 %v2166
    %v2238 = vunpack.c.l.b16 %v2167
    %v2239 = vunpack.c.l.b16 %v2168
    %v2240 = vunpack.c.l.b16 %v2169
    %v2241 = vunpack.c.l.b16 %v2170
    %v2242 = vunpack.c.l.b16 %v2171
    %v2243 = vunpack.c.l.b16 %v2172
    %v2244 = vunpack.c.l.b16 %v2173
    %v2245 = vunpack.c.l.b16 %v2174
    %v2246 = vunpack.c.l.b16 %v2175
    %v2247 = vunpack.c.l.b16 %v2176
    %v2248 = vunpack.c.l.b16 %v2177
    %v2249 = vpack.c.b16 %v2218, %v2217
    %v2250 = vpack.c.b16 %v2220, %v2219
    %v2251 = vpack.c.b16 %v2222, %v2221
    %v2252 = vpack.c.b16 %v2224, %v2223
    %v2253 = vpack.c.b16 %v2226, %v2225
    %v2254 = vpack.c.b16 %v2228, %v2227
    %v2255 = vpack.c.b16 %v2230, %v2229
    %v2256 = vpack.c.b16 %v2232, %v2231
    %v2257 = vpack.c.b16 %v2234, %v2233
    %v2258 = vpack.c.b16 %v2236, %v2235
    %v2259 = vpack.c.b16 %v2238, %v2237
    %v2260 = vpack.c.b16 %v2240, %v2239
    %v2261 = vpack.c.b16 %v2242, %v2241
    %v2262 = vpack.c.b16 %v2244, %v2243
    %v2263 = vpack.c.b16 %v2246, %v2245
    %v2264 = vpack.c.b16 %v2248, %v2247
    %2281 = vmatprep.subr.bf16.mxu0 0
    %2282 = vmatpush1.bf16.msra.mxu0 %v2256
    %2283 = vmatprep.subr.bf16.mxu0 0
    %2284 = vmatpush1.bf16.msra.mxu0 %v2255
    %2285 = vmatprep.subr.bf16.mxu0 0
    %2286 = vmatpush1.bf16.msra.mxu0 %v2254
    %2287 = vmatprep.subr.bf16.mxu0 0
    %2288 = vmatpush1.bf16.msra.mxu0 %v2253
    %2289 = vmatprep.subr.bf16.mxu0 0
    %2290 = vmatpush1.bf16.msra.mxu0 %v2252
    %2291 = vmatprep.subr.bf16.mxu0 0
    %2292 = vmatpush1.bf16.msra.mxu0 %v2251
    %2293 = vmatprep.subr.bf16.mxu0 0
    %2294 = vmatpush1.bf16.msra.mxu0 %v2250
    %2295 = vmatprep.subr.bf16.mxu0 0
    %2296 = vmatpush1.bf16.msra.mxu0 %v2249
    %2297 = vmatprep.subr.bf16.mxu0 0
    %2298 = vmatpush2.bf16.msra.mxu0 %v2264
    %2299 = vmatprep.subr.bf16.mxu0 0
    %2300 = vmatpush2.bf16.msra.mxu0 %v2263
    %2301 = vmatprep.subr.bf16.mxu0 0
    %2302 = vmatpush2.bf16.msra.mxu0 %v2262
    %2303 = vmatprep.subr.bf16.mxu0 0
    %2304 = vmatpush2.bf16.msra.mxu0 %v2261
    %2305 = vmatprep.subr.bf16.mxu0 0
    %2306 = vmatpush2.bf16.msra.mxu0 %v2260
    %2307 = vmatprep.subr.bf16.mxu0 0
    %2308 = vmatpush2.bf16.msra.mxu0 %v2259
    %2309 = vmatprep.subr.bf16.mxu0 0
    %2310 = vmatpush2.bf16.msra.mxu0 %v2258
    %2311 = vmatprep.subr.bf16.mxu0 0
    %2312 = vmatpush2.bf16.msra.mxu0 %v2257
    %2313 = vmatprep.mubr.bf16.mxu0 %v2145
    %2314 = vmatmul.mubr.bf16.gmra.mxu0 %v2144
    %v2315 = vpop.f32.mrf.mxu0
    %v2316 = vadd.f32 %v2183, %v2315
    %v2317 = vpop.f32.mrf.mxu0
    %v2318 = vpop.f32.mrf.mxu0
    %v2319 = vpop.f32.mrf.mxu0
    %2320 = vdwg.mxu0
    %v2321 = vmax.f32 %v2316, 0.0
    %v2322 = vpack.c.bf16 %v2321, %v2321
    %v2323 = vld [vmem:[#allocation11] sm:$0xf]
    %v2324 = vld [vmem:[#allocation11 + $0x4] sm:$0xf]
    %v2325 = vld [vmem:[#allocation11 + $0x8] sm:$0xf]
    %v2326 = vld [vmem:[#allocation11 + $0xc] sm:$0xf]
    %v2327 = vld [vmem:[#allocation11 + $0x10] sm:$0xf]
    %v2328 = vld [vmem:[#allocation11 + $0x14] sm:$0xf]
    %v2329 = vld [vmem:[#allocation11 + $0x18] sm:$0xf]
    %v2330 = vld [vmem:[#allocation11 + $0x1c] sm:$0xf]
    %v2331 = vld [vmem:[#allocation11 + $0x20] sm:$0xf]
    %v2332 = vld [vmem:[#allocation11 + $0x24] sm:$0xf]
    %v2333 = vld [vmem:[#allocation11 + $0x28] sm:$0xf]
    %v2334 = vld [vmem:[#allocation11 + $0x2c] sm:$0xf]
    %v2335 = vld [vmem:[#allocation11 + $0x30] sm:$0xf]
    %v2336 = vld [vmem:[#allocation11 + $0x34] sm:$0xf]
    %v2337 = vld [vmem:[#allocation11 + $0x38] sm:$0xf]
    %v2338 = vld [vmem:[#allocation11 + $0x3c] sm:$0xf]
    %v2339 = vld [vmem:[%s8] sm:$0x1]
    %v2341 = vlaneseq
    %v2342 = vshrl.u32 %v2341, 7
    %v2343 = vsub.s32 0, %v2342
    %v2344 = vrot.slane %v2339, %v2343
    %v2362 = vunpack.c.l.b16 %v2323
    %v2363 = vunpack.c.l.b16 %v2324
    %v2364 = vunpack.c.l.b16 %v2325
    %v2365 = vunpack.c.l.b16 %v2326
    %v2366 = vunpack.c.l.b16 %v2327
    %v2367 = vunpack.c.l.b16 %v2328
    %v2368 = vunpack.c.l.b16 %v2329
    %v2369 = vunpack.c.l.b16 %v2330
    %v2370 = vunpack.c.l.b16 %v2331
    %v2371 = vunpack.c.l.b16 %v2332
    %v2372 = vunpack.c.l.b16 %v2333
    %v2373 = vunpack.c.l.b16 %v2334
    %v2374 = vunpack.c.l.b16 %v2335
    %v2375 = vunpack.c.l.b16 %v2336
    %v2376 = vunpack.c.l.b16 %v2337
    %v2377 = vunpack.c.l.b16 %v2338
    %v2378 = vpack.c.b16 %v2363, %v2362
    %v2379 = vpack.c.b16 %v2365, %v2364
    %v2380 = vpack.c.b16 %v2367, %v2366
    %v2381 = vpack.c.b16 %v2369, %v2368
    %v2382 = vpack.c.b16 %v2371, %v2370
    %v2383 = vpack.c.b16 %v2373, %v2372
    %v2384 = vpack.c.b16 %v2375, %v2374
    %v2385 = vpack.c.b16 %v2377, %v2376
    %2394 = vmatprep.subr.bf16.mxu0 0
    %2395 = vmatpush1.bf16.msra.mxu0 %v2385
    %2396 = vmatprep.subr.bf16.mxu0 0
    %2397 = vmatpush1.bf16.msra.mxu0 %v2384
    %2398 = vmatprep.subr.bf16.mxu0 0
    %2399 = vmatpush1.bf16.msra.mxu0 %v2383
    %2400 = vmatprep.subr.bf16.mxu0 0
    %2401 = vmatpush1.bf16.msra.mxu0 %v2382
    %2402 = vmatprep.subr.bf16.mxu0 0
    %2403 = vmatpush1.bf16.msra.mxu0 %v2381
    %2404 = vmatprep.subr.bf16.mxu0 0
    %2405 = vmatpush1.bf16.msra.mxu0 %v2380
    %2406 = vmatprep.subr.bf16.mxu0 0
    %2407 = vmatpush1.bf16.msra.mxu0 %v2379
    %2408 = vmatprep.subr.bf16.mxu0 0
    %2409 = vmatpush1.bf16.msra.mxu0 %v2378
    %2410 = vmatprep.subr.bf16.mxu0 0
    %2411 = vmatpush2.bf16.msra.mxu0 0
    %2412 = vmatprep.subr.bf16.mxu0 0
    %2413 = vmatpush2.bf16.msra.mxu0 0
    %2414 = vmatprep.subr.bf16.mxu0 0
    %2415 = vmatpush2.bf16.msra.mxu0 0
    %2416 = vmatprep.subr.bf16.mxu0 0
    %2417 = vmatpush2.bf16.msra.mxu0 0
    %2418 = vmatprep.subr.bf16.mxu0 0
    %2419 = vmatpush2.bf16.msra.mxu0 0
    %2420 = vmatprep.subr.bf16.mxu0 0
    %2421 = vmatpush2.bf16.msra.mxu0 0
    %2422 = vmatprep.subr.bf16.mxu0 0
    %2423 = vmatpush2.bf16.msra.mxu0 0
    %2424 = vmatprep.subr.bf16.mxu0 0
    %2425 = vmatpush2.bf16.msra.mxu0 0
    %2426 = vmatprep.mubr.bf16.mxu0 0
    %2427 = vmatmul.mubr.bf16.gmra.mxu0 %v2322
    %v2428 = vpop.f32.mrf.mxu0
    %v2429 = vadd.f32 %v2344, %v2428
    %v2430 = vpop.f32.mrf.mxu0
    %v2431 = vpop.f32.mrf.mxu0
    %v2432 = vpop.f32.mrf.mxu0
    %2433 = vdwg.mxu0
    %v2434 = vxor.u32 %v2429, 2147483648
    %v2435 = vmul.f32 %v2434, 1.442695
    %v2436 = vpow.pop %v2435
    %v2437 = vadd.f32 %v2436, 1.0
    %v2438 = vrcp.pop %v2437
    %v2439 = vmul.f32 1.0, %v2438
    %2440 = vst [vmem:[#allocation13] sm:$0xff] %v2439
    // Predicated region
    $region62: #{tpu_custom_call.1} parent=1 // pred_check
      _
    $region63: #{tpu_custom_call.1} parent=1 // pred_check_branch
      %2442 = sbr.rel (0) target = $region65
    $region64: #{tpu_custom_call.1} parent=1 // pred_region
      %s2444 = ssub.s32 128, 128
      %2445 = vsyncadd [#allocation4], %s2444
      %s2447 = sshll.u32 [#allocation13], 4
      %s2448 = int_to_ptr.vmem [resolvable:$true] %s2447
      %2450 = dma.vmem_to_hbm [thread:$0]  %s2448, 128, %s9, [#allocation4]
    $region65: #{tpu_custom_call.1} parent=1 // pred_fallthru
      _
    // Predicated region
    $region66: #{tpu_custom_call.1} parent=1 // pred_check
      _
    $region67: #{tpu_custom_call.1} parent=1 // pred_check_branch
      %2452 = sbr.rel (0) target = $region69
    $region68: #{tpu_custom_call.1} parent=1 // pred_region
      %2453 = dma.done [#allocation4], 128
    $region69: #{tpu_custom_call.1} parent=1 // pred_fallthru
      _
    %2454 = vsyncpa [#allocation3], 1
    %2455 = vsyncpa [#allocation6], 1
    %2456 = vsyncpa [#allocation9], 1
    %2457 = vsyncpa [#allocation12], 1
    %2458 = vsyncpa [#allocation4], 1

</llo_original>
